<compile_context>
chip_gen: v7x
topology: tpu7x:2x2x1
jax: 0.10.0
libtpu: 0.0.40
codegen_flags: <defaults>
</compile_context>

<pallas_src>
import jax
import jax.numpy as jnp
from jax import lax
from jax.experimental import pallas as pl
from jax.experimental.pallas import tpu as pltpu

EPS = 1e-5


def _round_up(v, m):
    return ((v + m - 1) // m) * m


def _largest_divisor(n, cap):
    best = 1
    for d in range(1, min(n, cap) + 1):
        if n % d == 0:
            best = d
    return best


def _fold_bn(gamma, beta, mean, var):
    scale = gamma / jnp.sqrt(var + EPS)
    shift = beta - mean * scale
    return scale, shift


# ---------------------------------------------------------------------------
# Kernel 1: fused bn1 + relu1 + conv1(1x1, bn2-scale folded) + shift2 + relu2
#   x_ref  : (TILE_M, C_in)    pixel tile (f32 if C_in<=8 else bf16)
#   s1/b1  : (1, C_in)         folded BN1 scale / shift (f32)
#   w1_ref : (C_in, C_pad)     1x1 conv weight, bn2 scale folded, lane-padded
#   sh2    : (1, C_pad)        folded BN2 shift, lane-padded (f32)
#   o_ref  : (TILE_M, C_pad)   relu2(bn2(conv1(relu1(bn1(x)))))   (bf16)
# ---------------------------------------------------------------------------
def _bn_relu_conv1x1_bn_relu_kernel(x_ref, s1_ref, b1_ref, w1_ref, sh2_ref, o_ref):
    c_in = x_ref.shape[1]
    c_out = w1_ref.shape[1]

    # BN + ReLU in f32 on the VPU (v5e has no bf16 VPU path).
    xv = x_ref[...].astype(jnp.float32)
    a = jnp.maximum(xv * s1_ref[...] + b1_ref[...], 0.0)

    if c_in <= 8:
        # Tiny K: skip the MXU, short broadcast-FMA chain on the VPU (f32).
        y = jnp.zeros((a.shape[0], c_out), jnp.float32)
        for c in range(c_in):
            y = y + a[:, c:c + 1] * w1_ref[c:c + 1, :].astype(jnp.float32)
    else:
        # bf16 operands, f32 accumulation on the MXU.
        y = jnp.dot(a.astype(w1_ref.dtype), w1_ref[...],
                    preferred_element_type=jnp.float32)

    o_ref[...] = jnp.maximum(y + sh2_ref[...], 0.0).astype(o_ref.dtype)


# ---------------------------------------------------------------------------
# Kernel 2: 3x3 conv (stride 1, pad 1) for one (batch, H-tile) output block.
#   act_ref : (1, H, W, C)            bf16 full image (resident per batch idx)
#   w2_ref  : (3, 3*C, G_pad)         bf16 weights, [kh, kw*C + c, g]
#   o_ref   : (1, TILE_H, W, G_pad)   bf16 output block (lane-dense stores)
#   pad_ref : (TILE_H+2, W, 3*C)      bf16 scratch slab; channel group kw holds
#                                     the activation shifted by (kw-1) along W
#   acc_ref : (TILE_H*W, G_pad)       f32 VMEM accumulator
# ---------------------------------------------------------------------------
def _conv3x3_kernel(act_ref, w2_ref, o_ref, pad_ref, acc_ref):
    tile_h = o_ref.shape[1]
    wd = o_ref.shape[2]
    g_pad = o_ref.shape[3]
    c = act_ref.shape[3]
    dt = pad_ref.dtype

    t = pl.program_id(1)
    last = pl.num_programs(1) - 1
    row0 = t * tile_h

    # ---- frame zeroing only (interior fully overwritten below) -------------
    # Left pad column of the kw=0 group and right pad column of the kw=2 group.
    pad_ref[:, pl.ds(0, 1), pl.ds(0, c)] = jnp.zeros((tile_h + 2, 1, c), dt)
    pad_ref[:, pl.ds(wd - 1, 1), pl.ds(2 * c, c)] = jnp.zeros((tile_h + 2, 1, c), dt)

    @pl.when(t == 0)
    def _zero_top():          # image top boundary row
        pad_ref[pl.ds(0, 1), :, :] = jnp.zeros((1, wd, 3 * c), dt)

    @pl.when(t == last)
    def _zero_bottom():       # image bottom boundary row
        pad_ref[pl.ds(tile_h + 1, 1), :, :] = jnp.zeros((1, wd, 3 * c), dt)

    # ---- interior rows: write the three kw-shifted channel groups ----------
    rows = act_ref[0, pl.ds(row0, tile_h), :, :]                       # (TILE_H, W, C)
    pad_ref[pl.ds(1, tile_h), pl.ds(1, wd - 1), pl.ds(0, c)] = rows[:, :wd - 1, :]
    pad_ref[pl.ds(1, tile_h), :, pl.ds(c, c)] = rows
    pad_ref[pl.ds(1, tile_h), pl.ds(0, wd - 1), pl.ds(2 * c, c)] = rows[:, 1:, :]

    # ---- halo rows (read from the resident full image) ---------------------
    @pl.when(t > 0)
    def _top_halo():
        r = act_ref[0, pl.ds(row0 - 1, 1), :, :]                       # (1, W, C)
        pad_ref[pl.ds(0, 1), pl.ds(1, wd - 1), pl.ds(0, c)] = r[:, :wd - 1, :]
        pad_ref[pl.ds(0, 1), :, pl.ds(c, c)] = r
        pad_ref[pl.ds(0, 1), pl.ds(0, wd - 1), pl.ds(2 * c, c)] = r[:, 1:, :]

    @pl.when(t < last)
    def _bottom_halo():
        r = act_ref[0, pl.ds(row0 + tile_h, 1), :, :]
        pad_ref[pl.ds(tile_h + 1, 1), pl.ds(1, wd - 1), pl.ds(0, c)] = r[:, :wd - 1, :]
        pad_ref[pl.ds(tile_h + 1, 1), :, pl.ds(c, c)] = r
        pad_ref[pl.ds(tile_h + 1, 1), pl.ds(0, wd - 1), pl.ds(2 * c, c)] = r[:, 1:, :]

    # ---- 3 deep-K matmuls (K = 3*C); only outer-dim (kh) slices of the slab.
    m = tile_h * wd
    lhs0 = pad_ref[pl.ds(0, tile_h), :, :].reshape(m, 3 * c)
    acc_ref[...] = jnp.dot(lhs0, w2_ref[0], preferred_element_type=jnp.float32)
    lhs1 = pad_ref[pl.ds(1, tile_h), :, :].reshape(m, 3 * c)
    acc_ref[...] += jnp.dot(lhs1, w2_ref[1], preferred_element_type=jnp.float32)
    lhs2 = pad_ref[pl.ds(2, tile_h), :, :].reshape(m, 3 * c)
    acc_ref[...] += jnp.dot(lhs2, w2_ref[2], preferred_element_type=jnp.float32)

    o_ref[0] = acc_ref[...].reshape(tile_h, wd, g_pad).astype(o_ref.dtype)


def dense_layer_forward(x_nchw, params):
    """Pallas implementation of _DenseLayer.forward (inference, drop_rate=0)."""
    if isinstance(x_nchw, (list, tuple)):
        # torch.cat(inputs, 1) branch of bn_function.
        x_nchw = jnp.concatenate(list(x_nchw), axis=1)

    N, C_in, H, W = x_nchw.shape
    C_mid = params["conv1_w"].shape[0]          # bn_size * growth_rate
    G = params["conv2_w"].shape[0]              # growth_rate
    C_pad = _round_up(C_mid, 128)               # lane-dense intermediate channels
    G_pad = _round_up(G, 128)                   # lane-dense output channels

    # NCHW -> NHWC (a full DenseNet should keep NHWC across layers instead).
    x = jnp.transpose(x_nchw, (0, 2, 3, 1))
    x = x.astype(jnp.float32 if C_in <= 8 else jnp.bfloat16)   # halve kernel-1 HBM read

    s1, sh1 = _fold_bn(params["bn1_gamma"], params["bn1_beta"],
                       params["bn1_mean"], params["bn1_var"])
    s2, sh2 = _fold_bn(params["bn2_gamma"], params["bn2_beta"],
                       params["bn2_mean"], params["bn2_var"])

    # conv1 weight (C_mid, C_in, 1, 1) -> (C_in, C_mid), bn2 scale folded in,
    # zero-padded on the output-channel dim to C_pad.
    w1 = jnp.transpose(params["conv1_w"][:, :, 0, 0], (1, 0)) * s2[None, :]
    w1 = jnp.pad(w1, ((0, 0), (0, C_pad - C_mid)))
    w1 = w1.astype(jnp.float32 if C_in <= 8 else jnp.bfloat16)
    sh2_p = jnp.pad(sh2, (0, C_pad - C_mid))

    # ---- kernel 1: tiled over pixels, auto-pipelined, megacore-parallel ----
    M = N * H * W
    TILE_M = M if M <= 1024 else 1024
    x_mat = x.reshape(M, C_in)

    act = pl.pallas_call(
        _bn_relu_conv1x1_bn_relu_kernel,
        out_shape=jax.ShapeDtypeStruct((M, C_pad), jnp.bfloat16),
        grid=(pl.cdiv(M, TILE_M),),
        in_specs=[
            pl.BlockSpec((TILE_M, C_in), lambda i: (i, 0)),
            pl.BlockSpec((1, C_in), lambda i: (0, 0)),
            pl.BlockSpec((1, C_in), lambda i: (0, 0)),
            pl.BlockSpec((C_in, C_pad), lambda i: (0, 0)),
            pl.BlockSpec((1, C_pad), lambda i: (0, 0)),
        ],
        out_specs=pl.BlockSpec((TILE_M, C_pad), lambda i: (i, 0)),
        compiler_params=pltpu.CompilerParams(
            dimension_semantics=("parallel",),
            vmem_limit_bytes=40 * 1024 * 1024),
    )(x_mat, s1[None, :], sh1[None, :], w1, sh2_p[None, :])

    # bf16 intermediate written once / read once; 3x3 halo handled in kernel 2.
    act_img = act.reshape(N, H, W, C_pad)

    # ---- kernel 2: 3x3 conv, grid over (batch, H-tiles) --------------------
    TILE_H = _largest_divisor(H, 32)
    n_h_tiles = H // TILE_H

    # torch conv2 weight (G, C_mid, 3, 3) -> (3, 3, C_pad, G_pad) -> (3, 3*C_pad, G_pad)
    # so that w2_fused[kh, kw*C_pad + c, g] matches the slab's kw channel groups.
    w2 = jnp.transpose(params["conv2_w"], (2, 3, 1, 0))
    w2 = jnp.pad(w2, ((0, 0), (0, 0), (0, C_pad - C_mid), (0, G_pad - G)))
    w2_fused = w2.reshape(3, 3 * C_pad, G_pad).astype(jnp.bfloat16)

    out_padded = pl.pallas_call(
        _conv3x3_kernel,
        out_shape=jax.ShapeDtypeStruct((N, H, W, G_pad), jnp.bfloat16),
        grid=(N, n_h_tiles),
        in_specs=[
            pl.BlockSpec((1, H, W, C_pad), lambda n, t: (n, 0, 0, 0)),
            pl.BlockSpec((3, 3 * C_pad, G_pad), lambda n, t: (0, 0, 0)),
        ],
        out_specs=pl.BlockSpec((1, TILE_H, W, G_pad), lambda n, t: (n, t, 0, 0)),
        scratch_shapes=[
            pltpu.VMEM((TILE_H + 2, W, 3 * C_pad), jnp.bfloat16),
            pltpu.VMEM((TILE_H * W, G_pad), jnp.float32),
        ],
        compiler_params=pltpu.CompilerParams(
            dimension_semantics=("parallel", "parallel"),
            vmem_limit_bytes=40 * 1024 * 1024),
    )(act_img, w2_fused)

    # TODO(synk): F.dropout(training=True, p>0) path not implemented; drop_rate=0.0 -> identity.

    out_nhwc = out_padded[..., :G].astype(jnp.float32)
    return jnp.transpose(out_nhwc, (0, 3, 1, 2))   # NHWC -> NCHW


# ---------------------------------------------------------------------------
# Deterministic parameter init (shapes from _DenseLayer.__init__)
# ---------------------------------------------------------------------------
def init_params(key, num_input_features, growth_rate, bn_size):
    c_mid = bn_size * growth_rate
    ks = jax.random.split(key, 10)
    p = {
        "bn1_gamma": jax.random.uniform(ks[0], (num_input_features,), minval=0.5, maxval=1.5),
        "bn1_beta": jax.random.normal(ks[1], (num_input_features,)) * 0.1,
        "bn1_mean": jax.random.normal(ks[2], (num_input_features,)) * 0.1,
        "bn1_var": jax.random.uniform(ks[3], (num_input_features,), minval=0.5, maxval=1.5),
        "conv1_w": jax.random.normal(ks[4], (c_mid, num_input_features, 1, 1)) * 0.1,
        "bn2_gamma": jax.random.uniform(ks[5], (c_mid,), minval=0.5, maxval=1.5),
        "bn2_beta": jax.random.normal(ks[6], (c_mid,)) * 0.1,
        "bn2_mean": jax.random.normal(ks[7], (c_mid,)) * 0.1,
        "bn2_var": jax.random.uniform(ks[8], (c_mid,), minval=0.5, maxval=1.5),
        "conv2_w": jax.random.normal(ks[9], (growth_rate, c_mid, 3, 3)) * 0.1,
    }
    return {k: v.astype(jnp.float32) for k, v in p.items()}


# ---------------------------------------------------------------------------
# Pure-JAX reference (NCHW, mirrors the PyTorch ops) for a sanity check
# ---------------------------------------------------------------------------
def reference_forward(x, p):
    def bn(t, g, b, m, v):
        g, b, m, v = (a[None, :, None, None] for a in (g, b, m, v))
        return (t - m) / jnp.sqrt(v + EPS) * g + b

    a = jax.nn.relu(bn(x, p["bn1_gamma"], p["bn1_beta"], p["bn1_mean"], p["bn1_var"]))
    y = lax.conv_general_dilated(a, p["conv1_w"], (1, 1), "VALID",
                                 dimension_numbers=("NCHW", "OIHW", "NCHW"))
    z = jax.nn.relu(bn(y, p["bn2_gamma"], p["bn2_beta"], p["bn2_mean"], p["bn2_var"]))
    out = lax.conv_general_dilated(z, p["conv2_w"], (1, 1), ((1, 1), (1, 1)),
                                   dimension_numbers=("NCHW", "OIHW", "NCHW"))
    return out


if __name__ == "__main__":
    key = jax.random.PRNGKey(0)
    kx, kp = jax.random.split(key)

    # small shapes: batch=2, num_input_features=4, spatial=16x16,
    # growth_rate=8, bn_size=4 (bottleneck channels = 32), drop_rate=0.0
    N, C_IN, H, W = 2, 4, 16, 16
    GROWTH_RATE, BN_SIZE = 8, 4

    x = jax.random.normal(kx, (N, C_IN, H, W), dtype=jnp.float32)
    params = init_params(kp, C_IN, GROWTH_RATE, BN_SIZE)

    out = dense_layer_forward(x, params)
    out = jax.block_until_ready(out)

    assert out.shape == (N, GROWTH_RATE, H, W), out.shape

    ref = reference_forward(x, params)
    if not bool(jnp.allclose(out, ref, rtol=5e-2, atol=5e-2)):
        max_err = float(jnp.max(jnp.abs(out - ref)))
        raise AssertionError(f"Pallas output mismatch vs reference, max abs err = {max_err}")

    print("KERNEL_OK")
</pallas_src>

<mosaic_0001>
module attributes {stable_mosaic.version = 11 : i64} {
  func.func @_bn_relu_conv1x1_bn_relu_kernel(%arg0: i32, %arg1: memref<512x4xf32, #tpu.memory_space<vmem>>, %arg2: memref<1x4xf32, #tpu.memory_space<vmem>>, %arg3: memref<1x4xf32, #tpu.memory_space<vmem>>, %arg4: memref<4x128xf32, #tpu.memory_space<vmem>>, %arg5: memref<1x128xf32, #tpu.memory_space<vmem>>, %arg6: memref<512x128xbf16, #tpu.memory_space<vmem>>) attributes {dimension_semantics = [#tpu.dimension_semantics<parallel>], iteration_bounds = array<i64: 1>, scalar_prefetch = 0 : i64, scratch_operands = 0 : i64, tpu.core_type = #tpu.core_type<tc>, window_params = [{transform_indices = @transform_0, window_bounds = array<i64: 512, 4>}, {pipeline_mode = #tpu.pipeline_mode<synchronous>, transform_indices = @transform_1, window_bounds = array<i64: 1, 4>}, {pipeline_mode = #tpu.pipeline_mode<synchronous>, transform_indices = @transform_2, window_bounds = array<i64: 1, 4>}, {pipeline_mode = #tpu.pipeline_mode<synchronous>, transform_indices = @transform_3, window_bounds = array<i64: 4, 128>}, {pipeline_mode = #tpu.pipeline_mode<synchronous>, transform_indices = @transform_4, window_bounds = array<i64: 1, 128>}, {transform_indices = @transform_5, window_bounds = array<i64: 512, 128>}]} {
    %c0 = arith.constant 0 : index
    %c0_0 = arith.constant 0 : index
    %0 = vector.load %arg1[%c0, %c0_0] : memref<512x4xf32, #tpu.memory_space<vmem>>, vector<512x4xf32>
    %c0_1 = arith.constant 0 : index
    %c0_2 = arith.constant 0 : index
    %1 = vector.load %arg2[%c0_1, %c0_2] : memref<1x4xf32, #tpu.memory_space<vmem>>, vector<1x4xf32>
    %2 = vector.broadcast %1 : vector<1x4xf32> to vector<512x4xf32>
    %3 = arith.mulf %0, %2 : vector<512x4xf32>
    %c0_3 = arith.constant 0 : index
    %c0_4 = arith.constant 0 : index
    %4 = vector.load %arg3[%c0_3, %c0_4] : memref<1x4xf32, #tpu.memory_space<vmem>>, vector<1x4xf32>
    %5 = vector.broadcast %4 : vector<1x4xf32> to vector<512x4xf32>
    %6 = arith.addf %3, %5 : vector<512x4xf32>
    %cst = arith.constant 0.000000e+00 : f32
    %7 = vector.broadcast %cst : f32 to vector<512x4xf32>
    %8 = arith.maximumf %6, %7 : vector<512x4xf32>
    %cst_5 = arith.constant 0.000000e+00 : f32
    %9 = vector.broadcast %cst_5 : f32 to vector<512x128xf32>
    %10 = vector.extract_strided_slice %8 {offsets = [0, 0], sizes = [512, 1], strides = [1, 1]} : vector<512x4xf32> to vector<512x1xf32>
    %c0_6 = arith.constant 0 : index
    %c0_7 = arith.constant 0 : index
    %11 = vector.load %arg4[%c0_6, %c0_7] : memref<4x128xf32, #tpu.memory_space<vmem>>, vector<1x128xf32>
    %12 = vector.broadcast %10 : vector<512x1xf32> to vector<512x128xf32>
    %13 = vector.broadcast %11 : vector<1x128xf32> to vector<512x128xf32>
    %14 = arith.mulf %12, %13 : vector<512x128xf32>
    %15 = arith.addf %9, %14 : vector<512x128xf32>
    %16 = vector.extract_strided_slice %8 {offsets = [0, 1], sizes = [512, 1], strides = [1, 1]} : vector<512x4xf32> to vector<512x1xf32>
    %c1 = arith.constant 1 : index
    %c0_8 = arith.constant 0 : index
    %17 = vector.load %arg4[%c1, %c0_8] : memref<4x128xf32, #tpu.memory_space<vmem>>, vector<1x128xf32>
    %18 = vector.broadcast %16 : vector<512x1xf32> to vector<512x128xf32>
    %19 = vector.broadcast %17 : vector<1x128xf32> to vector<512x128xf32>
    %20 = arith.mulf %18, %19 : vector<512x128xf32>
    %21 = arith.addf %15, %20 : vector<512x128xf32>
    %22 = vector.extract_strided_slice %8 {offsets = [0, 2], sizes = [512, 1], strides = [1, 1]} : vector<512x4xf32> to vector<512x1xf32>
    %c2 = arith.constant 2 : index
    %c0_9 = arith.constant 0 : index
    %23 = vector.load %arg4[%c2, %c0_9] : memref<4x128xf32, #tpu.memory_space<vmem>>, vector<1x128xf32>
    %24 = vector.broadcast %22 : vector<512x1xf32> to vector<512x128xf32>
    %25 = vector.broadcast %23 : vector<1x128xf32> to vector<512x128xf32>
    %26 = arith.mulf %24, %25 : vector<512x128xf32>
    %27 = arith.addf %21, %26 : vector<512x128xf32>
    %28 = vector.extract_strided_slice %8 {offsets = [0, 3], sizes = [512, 1], strides = [1, 1]} : vector<512x4xf32> to vector<512x1xf32>
    %c3 = arith.constant 3 : index
    %c0_10 = arith.constant 0 : index
    %29 = vector.load %arg4[%c3, %c0_10] : memref<4x128xf32, #tpu.memory_space<vmem>>, vector<1x128xf32>
    %30 = vector.broadcast %28 : vector<512x1xf32> to vector<512x128xf32>
    %31 = vector.broadcast %29 : vector<1x128xf32> to vector<512x128xf32>
    %32 = arith.mulf %30, %31 : vector<512x128xf32>
    %33 = arith.addf %27, %32 : vector<512x128xf32>
    %c0_11 = arith.constant 0 : index
    %c0_12 = arith.constant 0 : index
    %34 = vector.load %arg5[%c0_11, %c0_12] : memref<1x128xf32, #tpu.memory_space<vmem>>, vector<1x128xf32>
    %35 = vector.broadcast %34 : vector<1x128xf32> to vector<512x128xf32>
    %36 = arith.addf %33, %35 : vector<512x128xf32>
    %cst_13 = arith.constant 0.000000e+00 : f32
    %37 = vector.broadcast %cst_13 : f32 to vector<512x128xf32>
    %38 = arith.maximumf %36, %37 : vector<512x128xf32>
    %39 = arith.truncf %38 : vector<512x128xf32> to vector<512x128xbf16>
    %c0_14 = arith.constant 0 : index
    %c0_15 = arith.constant 0 : index
    %40 = vector.load %arg6[%c0_14, %c0_15] : memref<512x128xbf16, #tpu.memory_space<vmem>>, vector<512x128xbf16>
    tpu.vector_store %arg6[%c0_14, %c0_15], %39 {strides = array<i32>} : memref<512x128xbf16, #tpu.memory_space<vmem>>, vector<512x128xbf16>,
    return
  }
  func.func @transform_0(%arg0: i32) -> (i32, i32) {
    %c0_i32 = arith.constant 0 : i32
    %c0_i32_0 = arith.constant 0 : i32
    return %arg0, %c0_i32 : i32, i32
  }
  func.func @transform_1(%arg0: i32) -> (i32, i32) {
    %c0_i32 = arith.constant 0 : i32
    %c0_i32_0 = arith.constant 0 : i32
    %c0_i32_1 = arith.constant 0 : i32
    return %c0_i32, %c0_i32_0 : i32, i32
  }
  func.func @transform_2(%arg0: i32) -> (i32, i32) {
    %c0_i32 = arith.constant 0 : i32
    %c0_i32_0 = arith.constant 0 : i32
    %c0_i32_1 = arith.constant 0 : i32
    return %c0_i32, %c0_i32_0 : i32, i32
  }
  func.func @transform_3(%arg0: i32) -> (i32, i32) {
    %c0_i32 = arith.constant 0 : i32
    %c0_i32_0 = arith.constant 0 : i32
    %c0_i32_1 = arith.constant 0 : i32
    return %c0_i32, %c0_i32_0 : i32, i32
  }
  func.func @transform_4(%arg0: i32) -> (i32, i32) {
    %c0_i32 = arith.constant 0 : i32
    %c0_i32_0 = arith.constant 0 : i32
    %c0_i32_1 = arith.constant 0 : i32
    return %c0_i32, %c0_i32_0 : i32, i32
  }
  func.func @transform_5(%arg0: i32) -> (i32, i32) {
    %c0_i32 = arith.constant 0 : i32
    %c0_i32_0 = arith.constant 0 : i32
    return %arg0, %c0_i32 : i32, i32
  }
}

</mosaic_0001>

<llo_original>
// kernel: tpu_custom_call.1
$region0: #{tpu_custom_call.1}
  #allocation0 [shape = 'u32[]', space=smem, size = 0x4, offset = 0x4, fixed_abs, tag = 'smem constant byte address 0x4 - core index']
  #allocation1 [shape = 'u32[144,128]{1,0:T(1,128)}', space=vmem, size = 0x12000, scoped, tag = 'internal scratch']
  %s0 = inlined_call_operand.vmem [shape: f32[512,4], index: 0, kind: input, shape index: {}]
  %s1 = inlined_call_operand.vmem [shape: f32[1,4], index: 1, kind: input, shape index: {}]
  %s2 = inlined_call_operand.vmem [shape: f32[1,4], index: 2, kind: input, shape index: {}]
  %s3 = inlined_call_operand.vmem [shape: f32[4,128], index: 3, kind: input, shape index: {}]
  %s4 = inlined_call_operand.vmem [shape: f32[1,128], index: 4, kind: input, shape index: {}]
  %s5 = inlined_call_operand.hbm [shape: bf16[512,128], index: 5, kind: output, shape index: {}]
  %s6 = sld [smem:[#allocation0]]
  $region30: #{tpu_custom_call.1} parent=0
    _
  %s8 = ssub.s32 1, %s6
  %s9 = scalar_select 0, %s8, %s6
  $region1: #{tpu_custom_call.1} parent=0
    #allocation2 [shape = 'u8[131072]{0}', space=vmem, size = 0x20000, scoped, tag = 'output window, operand 0, single buffered']
    #allocation3 [shape = 's32[1]{0}', space=sflag, size = 0x4, scoped, tag = 'scoped memory for tpu_custom_call.1']
    %10 = vsyncpa [#allocation3], 0
    // Predicated region
    $region2: #{tpu_custom_call.1} parent=1 // pred_check
      _
    $region3: #{tpu_custom_call.1} parent=1 // pred_check_branch
      %12 = sbr.rel (0) target = $region5
    $region4: #{tpu_custom_call.1} parent=1 // pred_region
      _
    $region5: #{tpu_custom_call.1} parent=1 // pred_fallthru
      _
    // Predicated region
    $region6: #{tpu_custom_call.1} parent=1 // pred_check
      _
    $region7: #{tpu_custom_call.1} parent=1 // pred_check_branch
      %14 = sbr.rel (0) target = $region9
    $region8: #{tpu_custom_call.1} parent=1 // pred_region
      _
    $region9: #{tpu_custom_call.1} parent=1 // pred_fallthru
      _
    // Predicated region
    $region10: #{tpu_custom_call.1} parent=1 // pred_check
      _
    $region11: #{tpu_custom_call.1} parent=1 // pred_check_branch
      %16 = sbr.rel (0) target = $region13
    $region12: #{tpu_custom_call.1} parent=1 // pred_region
      _
    $region13: #{tpu_custom_call.1} parent=1 // pred_fallthru
      _
    // Predicated region
    $region14: #{tpu_custom_call.1} parent=1 // pred_check
      _
    $region15: #{tpu_custom_call.1} parent=1 // pred_check_branch
      %18 = sbr.rel (0) target = $region17
    $region16: #{tpu_custom_call.1} parent=1 // pred_region
      _
    $region17: #{tpu_custom_call.1} parent=1 // pred_fallthru
      _
    // Predicated region
    $region18: #{tpu_custom_call.1} parent=1 // pred_check
      _
    $region19: #{tpu_custom_call.1} parent=1 // pred_check_branch
      %20 = sbr.rel (0) target = $region21
    $region20: #{tpu_custom_call.1} parent=1 // pred_region
      _
    $region21: #{tpu_custom_call.1} parent=1 // pred_fallthru
      _
    %v21 = vld [vmem:[%s0] sm:$0xff]
    %v22 = vld [vmem:[%s0 + $0x8] sm:$0xff]
    %v23 = vld [vmem:[%s0 + $0x10] sm:$0xff]
    %v24 = vld [vmem:[%s0 + $0x18] sm:$0xff]
    %v25 = vld [vmem:[%s0 + $0x20] sm:$0xff]
    %v26 = vld [vmem:[%s0 + $0x28] sm:$0xff]
    %v27 = vld [vmem:[%s0 + $0x30] sm:$0xff]
    %v28 = vld [vmem:[%s0 + $0x38] sm:$0xff]
    %v29 = vld [vmem:[%s0 + $0x40] sm:$0xff]
    %v30 = vld [vmem:[%s0 + $0x48] sm:$0xff]
    %v31 = vld [vmem:[%s0 + $0x50] sm:$0xff]
    %v32 = vld [vmem:[%s0 + $0x58] sm:$0xff]
    %v33 = vld [vmem:[%s0 + $0x60] sm:$0xff]
    %v34 = vld [vmem:[%s0 + $0x68] sm:$0xff]
    %v35 = vld [vmem:[%s0 + $0x70] sm:$0xff]
    %v36 = vld [vmem:[%s0 + $0x78] sm:$0xff]
    %v37 = vld [vmem:[%s0 + $0x80] sm:$0xff]
    %v38 = vld [vmem:[%s0 + $0x88] sm:$0xff]
    %v39 = vld [vmem:[%s0 + $0x90] sm:$0xff]
    %v40 = vld [vmem:[%s0 + $0x98] sm:$0xff]
    %v41 = vld [vmem:[%s0 + $0xa0] sm:$0xff]
    %v42 = vld [vmem:[%s0 + $0xa8] sm:$0xff]
    %v43 = vld [vmem:[%s0 + $0xb0] sm:$0xff]
    %v44 = vld [vmem:[%s0 + $0xb8] sm:$0xff]
    %v45 = vld [vmem:[%s0 + $0xc0] sm:$0xff]
    %v46 = vld [vmem:[%s0 + $0xc8] sm:$0xff]
    %v47 = vld [vmem:[%s0 + $0xd0] sm:$0xff]
    %v48 = vld [vmem:[%s0 + $0xd8] sm:$0xff]
    %v49 = vld [vmem:[%s0 + $0xe0] sm:$0xff]
    %v50 = vld [vmem:[%s0 + $0xe8] sm:$0xff]
    %v51 = vld [vmem:[%s0 + $0xf0] sm:$0xff]
    %v52 = vld [vmem:[%s0 + $0xf8] sm:$0xff]
    %v53 = vld [vmem:[%s0 + $0x100] sm:$0xff]
    %v54 = vld [vmem:[%s0 + $0x108] sm:$0xff]
    %v55 = vld [vmem:[%s0 + $0x110] sm:$0xff]
    %v56 = vld [vmem:[%s0 + $0x118] sm:$0xff]
    %v57 = vld [vmem:[%s0 + $0x120] sm:$0xff]
    %v58 = vld [vmem:[%s0 + $0x128] sm:$0xff]
    %v59 = vld [vmem:[%s0 + $0x130] sm:$0xff]
    %v60 = vld [vmem:[%s0 + $0x138] sm:$0xff]
    %v61 = vld [vmem:[%s0 + $0x140] sm:$0xff]
    %v62 = vld [vmem:[%s0 + $0x148] sm:$0xff]
    %v63 = vld [vmem:[%s0 + $0x150] sm:$0xff]
    %v64 = vld [vmem:[%s0 + $0x158] sm:$0xff]
    %v65 = vld [vmem:[%s0 + $0x160] sm:$0xff]
    %v66 = vld [vmem:[%s0 + $0x168] sm:$0xff]
    %v67 = vld [vmem:[%s0 + $0x170] sm:$0xff]
    %v68 = vld [vmem:[%s0 + $0x178] sm:$0xff]
    %v69 = vld [vmem:[%s0 + $0x180] sm:$0xff]
    %v70 = vld [vmem:[%s0 + $0x188] sm:$0xff]
    %v71 = vld [vmem:[%s0 + $0x190] sm:$0xff]
    %v72 = vld [vmem:[%s0 + $0x198] sm:$0xff]
    %v73 = vld [vmem:[%s0 + $0x1a0] sm:$0xff]
    %v74 = vld [vmem:[%s0 + $0x1a8] sm:$0xff]
    %v75 = vld [vmem:[%s0 + $0x1b0] sm:$0xff]
    %v76 = vld [vmem:[%s0 + $0x1b8] sm:$0xff]
    %v77 = vld [vmem:[%s0 + $0x1c0] sm:$0xff]
    %v78 = vld [vmem:[%s0 + $0x1c8] sm:$0xff]
    %v79 = vld [vmem:[%s0 + $0x1d0] sm:$0xff]
    %v80 = vld [vmem:[%s0 + $0x1d8] sm:$0xff]
    %v81 = vld [vmem:[%s0 + $0x1e0] sm:$0xff]
    %v82 = vld [vmem:[%s0 + $0x1e8] sm:$0xff]
    %v83 = vld [vmem:[%s0 + $0x1f0] sm:$0xff]
    %v84 = vld [vmem:[%s0 + $0x1f8] sm:$0xff]
    %v85 = vld [vmem:[%s1] sm:$0x1]
    %v87 = vlaneseq
    %v88 = vshrl.u32 %v87, 7
    %v89 = vsub.s32 0, %v88
    %v90 = vrot.slane %v85, %v89
    %v92 = vmul.f32 %v21, %v90
    %v93 = vmul.f32 %v22, %v90
    %v94 = vmul.f32 %v23, %v90
    %v95 = vmul.f32 %v24, %v90
    %v96 = vmul.f32 %v25, %v90
    %v97 = vmul.f32 %v26, %v90
    %v98 = vmul.f32 %v27, %v90
    %v99 = vmul.f32 %v28, %v90
    %v100 = vmul.f32 %v29, %v90
    %v101 = vmul.f32 %v30, %v90
    %v102 = vmul.f32 %v31, %v90
    %v103 = vmul.f32 %v32, %v90
    %v104 = vmul.f32 %v33, %v90
    %v105 = vmul.f32 %v34, %v90
    %v106 = vmul.f32 %v35, %v90
    %v107 = vmul.f32 %v36, %v90
    %v108 = vmul.f32 %v37, %v90
    %v109 = vmul.f32 %v38, %v90
    %v110 = vmul.f32 %v39, %v90
    %v111 = vmul.f32 %v40, %v90
    %v112 = vmul.f32 %v41, %v90
    %v113 = vmul.f32 %v42, %v90
    %v114 = vmul.f32 %v43, %v90
    %v115 = vmul.f32 %v44, %v90
    %v116 = vmul.f32 %v45, %v90
    %v117 = vmul.f32 %v46, %v90
    %v118 = vmul.f32 %v47, %v90
    %v119 = vmul.f32 %v48, %v90
    %v120 = vmul.f32 %v49, %v90
    %v121 = vmul.f32 %v50, %v90
    %v122 = vmul.f32 %v51, %v90
    %v123 = vmul.f32 %v52, %v90
    %v124 = vmul.f32 %v53, %v90
    %v125 = vmul.f32 %v54, %v90
    %v126 = vmul.f32 %v55, %v90
    %v127 = vmul.f32 %v56, %v90
    %v128 = vmul.f32 %v57, %v90
    %v129 = vmul.f32 %v58, %v90
    %v130 = vmul.f32 %v59, %v90
    %v131 = vmul.f32 %v60, %v90
    %v132 = vmul.f32 %v61, %v90
    %v133 = vmul.f32 %v62, %v90
    %v134 = vmul.f32 %v63, %v90
    %v135 = vmul.f32 %v64, %v90
    %v136 = vmul.f32 %v65, %v90
    %v137 = vmul.f32 %v66, %v90
    %v138 = vmul.f32 %v67, %v90
    %v139 = vmul.f32 %v68, %v90
    %v140 = vmul.f32 %v69, %v90
    %v141 = vmul.f32 %v70, %v90
    %v142 = vmul.f32 %v71, %v90
    %v143 = vmul.f32 %v72, %v90
    %v144 = vmul.f32 %v73, %v90
    %v145 = vmul.f32 %v74, %v90
    %v146 = vmul.f32 %v75, %v90
    %v147 = vmul.f32 %v76, %v90
    %v148 = vmul.f32 %v77, %v90
    %v149 = vmul.f32 %v78, %v90
    %v150 = vmul.f32 %v79, %v90
    %v151 = vmul.f32 %v80, %v90
    %v152 = vmul.f32 %v81, %v90
    %v153 = vmul.f32 %v82, %v90
    %v154 = vmul.f32 %v83, %v90
    %v155 = vmul.f32 %v84, %v90
    %v156 = vld [vmem:[%s2] sm:$0x1]
    %v158 = vlaneseq
    %v159 = vshrl.u32 %v158, 7
    %v160 = vsub.s32 0, %v159
    %v161 = vrot.slane %v156, %v160
    %v163 = vadd.f32 %v92, %v161
    %v164 = vadd.f32 %v93, %v161
    %v165 = vadd.f32 %v94, %v161
    %v166 = vadd.f32 %v95, %v161
    %v167 = vadd.f32 %v96, %v161
    %v168 = vadd.f32 %v97, %v161
    %v169 = vadd.f32 %v98, %v161
    %v170 = vadd.f32 %v99, %v161
    %v171 = vadd.f32 %v100, %v161
    %v172 = vadd.f32 %v101, %v161
    %v173 = vadd.f32 %v102, %v161
    %v174 = vadd.f32 %v103, %v161
    %v175 = vadd.f32 %v104, %v161
    %v176 = vadd.f32 %v105, %v161
    %v177 = vadd.f32 %v106, %v161
    %v178 = vadd.f32 %v107, %v161
    %v179 = vadd.f32 %v108, %v161
    %v180 = vadd.f32 %v109, %v161
    %v181 = vadd.f32 %v110, %v161
    %v182 = vadd.f32 %v111, %v161
    %v183 = vadd.f32 %v112, %v161
    %v184 = vadd.f32 %v113, %v161
    %v185 = vadd.f32 %v114, %v161
    %v186 = vadd.f32 %v115, %v161
    %v187 = vadd.f32 %v116, %v161
    %v188 = vadd.f32 %v117, %v161
    %v189 = vadd.f32 %v118, %v161
    %v190 = vadd.f32 %v119, %v161
    %v191 = vadd.f32 %v120, %v161
    %v192 = vadd.f32 %v121, %v161
    %v193 = vadd.f32 %v122, %v161
    %v194 = vadd.f32 %v123, %v161
    %v195 = vadd.f32 %v124, %v161
    %v196 = vadd.f32 %v125, %v161
    %v197 = vadd.f32 %v126, %v161
    %v198 = vadd.f32 %v127, %v161
    %v199 = vadd.f32 %v128, %v161
    %v200 = vadd.f32 %v129, %v161
    %v201 = vadd.f32 %v130, %v161
    %v202 = vadd.f32 %v131, %v161
    %v203 = vadd.f32 %v132, %v161
    %v204 = vadd.f32 %v133, %v161
    %v205 = vadd.f32 %v134, %v161
    %v206 = vadd.f32 %v135, %v161
    %v207 = vadd.f32 %v136, %v161
    %v208 = vadd.f32 %v137, %v161
    %v209 = vadd.f32 %v138, %v161
    %v210 = vadd.f32 %v139, %v161
    %v211 = vadd.f32 %v140, %v161
    %v212 = vadd.f32 %v141, %v161
    %v213 = vadd.f32 %v142, %v161
    %v214 = vadd.f32 %v143, %v161
    %v215 = vadd.f32 %v144, %v161
    %v216 = vadd.f32 %v145, %v161
    %v217 = vadd.f32 %v146, %v161
    %v218 = vadd.f32 %v147, %v161
    %v219 = vadd.f32 %v148, %v161
    %v220 = vadd.f32 %v149, %v161
    %v221 = vadd.f32 %v150, %v161
    %v222 = vadd.f32 %v151, %v161
    %v223 = vadd.f32 %v152, %v161
    %v224 = vadd.f32 %v153, %v161
    %v225 = vadd.f32 %v154, %v161
    %v226 = vadd.f32 %v155, %v161
    %v227 = vmax.f32 %v163, 0.0
    %v228 = vmax.f32 %v164, 0.0
    %v229 = vmax.f32 %v165, 0.0
    %v230 = vmax.f32 %v166, 0.0
    %v231 = vmax.f32 %v167, 0.0
    %v232 = vmax.f32 %v168, 0.0
    %v233 = vmax.f32 %v169, 0.0
    %v234 = vmax.f32 %v170, 0.0
    %v235 = vmax.f32 %v171, 0.0
    %v236 = vmax.f32 %v172, 0.0
    %v237 = vmax.f32 %v173, 0.0
    %v238 = vmax.f32 %v174, 0.0
    %v239 = vmax.f32 %v175, 0.0
    %v240 = vmax.f32 %v176, 0.0
    %v241 = vmax.f32 %v177, 0.0
    %v242 = vmax.f32 %v178, 0.0
    %v243 = vmax.f32 %v179, 0.0
    %v244 = vmax.f32 %v180, 0.0
    %v245 = vmax.f32 %v181, 0.0
    %v246 = vmax.f32 %v182, 0.0
    %v247 = vmax.f32 %v183, 0.0
    %v248 = vmax.f32 %v184, 0.0
    %v249 = vmax.f32 %v185, 0.0
    %v250 = vmax.f32 %v186, 0.0
    %v251 = vmax.f32 %v187, 0.0
    %v252 = vmax.f32 %v188, 0.0
    %v253 = vmax.f32 %v189, 0.0
    %v254 = vmax.f32 %v190, 0.0
    %v255 = vmax.f32 %v191, 0.0
    %v256 = vmax.f32 %v192, 0.0
    %v257 = vmax.f32 %v193, 0.0
    %v258 = vmax.f32 %v194, 0.0
    %v259 = vmax.f32 %v195, 0.0
    %v260 = vmax.f32 %v196, 0.0
    %v261 = vmax.f32 %v197, 0.0
    %v262 = vmax.f32 %v198, 0.0
    %v263 = vmax.f32 %v199, 0.0
    %v264 = vmax.f32 %v200, 0.0
    %v265 = vmax.f32 %v201, 0.0
    %v266 = vmax.f32 %v202, 0.0
    %v267 = vmax.f32 %v203, 0.0
    %v268 = vmax.f32 %v204, 0.0
    %v269 = vmax.f32 %v205, 0.0
    %v270 = vmax.f32 %v206, 0.0
    %v271 = vmax.f32 %v207, 0.0
    %v272 = vmax.f32 %v208, 0.0
    %v273 = vmax.f32 %v209, 0.0
    %v274 = vmax.f32 %v210, 0.0
    %v275 = vmax.f32 %v211, 0.0
    %v276 = vmax.f32 %v212, 0.0
    %v277 = vmax.f32 %v213, 0.0
    %v278 = vmax.f32 %v214, 0.0
    %v279 = vmax.f32 %v215, 0.0
    %v280 = vmax.f32 %v216, 0.0
    %v281 = vmax.f32 %v217, 0.0
    %v282 = vmax.f32 %v218, 0.0
    %v283 = vmax.f32 %v219, 0.0
    %v284 = vmax.f32 %v220, 0.0
    %v285 = vmax.f32 %v221, 0.0
    %v286 = vmax.f32 %v222, 0.0
    %v287 = vmax.f32 %v223, 0.0
    %v288 = vmax.f32 %v224, 0.0
    %v289 = vmax.f32 %v225, 0.0
    %v290 = vmax.f32 %v226, 0.0
    %v291 = vld [vmem:[%s3] sm:$0x1]
    %293 = vset.pattern.permute.xlu0 0
    %294 = vperm.xlu0 %293, %v227
    %v295 = vpop.permute.xlu0 %294
    %298 = vset.pattern.permute.xlu0 0
    %299 = vperm.xlu0 %298, %v228
    %v300 = vpop.permute.xlu0 %299
    %303 = vset.pattern.permute.xlu0 0
    %304 = vperm.xlu0 %303, %v229
    %v305 = vpop.permute.xlu0 %304
    %308 = vset.pattern.permute.xlu0 0
    %309 = vperm.xlu0 %308, %v230
    %v310 = vpop.permute.xlu0 %309
    %313 = vset.pattern.permute.xlu0 0
    %314 = vperm.xlu0 %313, %v231
    %v315 = vpop.permute.xlu0 %314
    %318 = vset.pattern.permute.xlu0 0
    %319 = vperm.xlu0 %318, %v232
    %v320 = vpop.permute.xlu0 %319
    %323 = vset.pattern.permute.xlu0 0
    %324 = vperm.xlu0 %323, %v233
    %v325 = vpop.permute.xlu0 %324
    %328 = vset.pattern.permute.xlu0 0
    %329 = vperm.xlu0 %328, %v234
    %v330 = vpop.permute.xlu0 %329
    %333 = vset.pattern.permute.xlu0 0
    %334 = vperm.xlu0 %333, %v235
    %v335 = vpop.permute.xlu0 %334
    %338 = vset.pattern.permute.xlu0 0
    %339 = vperm.xlu0 %338, %v236
    %v340 = vpop.permute.xlu0 %339
    %343 = vset.pattern.permute.xlu0 0
    %344 = vperm.xlu0 %343, %v237
    %v345 = vpop.permute.xlu0 %344
    %348 = vset.pattern.permute.xlu0 0
    %349 = vperm.xlu0 %348, %v238
    %v350 = vpop.permute.xlu0 %349
    %353 = vset.pattern.permute.xlu0 0
    %354 = vperm.xlu0 %353, %v239
    %v355 = vpop.permute.xlu0 %354
    %358 = vset.pattern.permute.xlu0 0
    %359 = vperm.xlu0 %358, %v240
    %v360 = vpop.permute.xlu0 %359
    %363 = vset.pattern.permute.xlu0 0
    %364 = vperm.xlu0 %363, %v241
    %v365 = vpop.permute.xlu0 %364
    %368 = vset.pattern.permute.xlu0 0
    %369 = vperm.xlu0 %368, %v242
    %v370 = vpop.permute.xlu0 %369
    %373 = vset.pattern.permute.xlu0 0
    %374 = vperm.xlu0 %373, %v243
    %v375 = vpop.permute.xlu0 %374
    %378 = vset.pattern.permute.xlu0 0
    %379 = vperm.xlu0 %378, %v244
    %v380 = vpop.permute.xlu0 %379
    %383 = vset.pattern.permute.xlu0 0
    %384 = vperm.xlu0 %383, %v245
    %v385 = vpop.permute.xlu0 %384
    %388 = vset.pattern.permute.xlu0 0
    %389 = vperm.xlu0 %388, %v246
    %v390 = vpop.permute.xlu0 %389
    %393 = vset.pattern.permute.xlu0 0
    %394 = vperm.xlu0 %393, %v247
    %v395 = vpop.permute.xlu0 %394
    %398 = vset.pattern.permute.xlu0 0
    %399 = vperm.xlu0 %398, %v248
    %v400 = vpop.permute.xlu0 %399
    %403 = vset.pattern.permute.xlu0 0
    %404 = vperm.xlu0 %403, %v249
    %v405 = vpop.permute.xlu0 %404
    %408 = vset.pattern.permute.xlu0 0
    %409 = vperm.xlu0 %408, %v250
    %v410 = vpop.permute.xlu0 %409
    %413 = vset.pattern.permute.xlu0 0
    %414 = vperm.xlu0 %413, %v251
    %v415 = vpop.permute.xlu0 %414
    %418 = vset.pattern.permute.xlu0 0
    %419 = vperm.xlu0 %418, %v252
    %v420 = vpop.permute.xlu0 %419
    %423 = vset.pattern.permute.xlu0 0
    %424 = vperm.xlu0 %423, %v253
    %v425 = vpop.permute.xlu0 %424
    %428 = vset.pattern.permute.xlu0 0
    %429 = vperm.xlu0 %428, %v254
    %v430 = vpop.permute.xlu0 %429
    %433 = vset.pattern.permute.xlu0 0
    %434 = vperm.xlu0 %433, %v255
    %v435 = vpop.permute.xlu0 %434
    %438 = vset.pattern.permute.xlu0 0
    %439 = vperm.xlu0 %438, %v256
    %v440 = vpop.permute.xlu0 %439
    %443 = vset.pattern.permute.xlu0 0
    %444 = vperm.xlu0 %443, %v257
    %v445 = vpop.permute.xlu0 %444
    %448 = vset.pattern.permute.xlu0 0
    %449 = vperm.xlu0 %448, %v258
    %v450 = vpop.permute.xlu0 %449
    %453 = vset.pattern.permute.xlu0 0
    %454 = vperm.xlu0 %453, %v259
    %v455 = vpop.permute.xlu0 %454
    %458 = vset.pattern.permute.xlu0 0
    %459 = vperm.xlu0 %458, %v260
    %v460 = vpop.permute.xlu0 %459
    %463 = vset.pattern.permute.xlu0 0
    %464 = vperm.xlu0 %463, %v261
    %v465 = vpop.permute.xlu0 %464
    %468 = vset.pattern.permute.xlu0 0
    %469 = vperm.xlu0 %468, %v262
    %v470 = vpop.permute.xlu0 %469
    %473 = vset.pattern.permute.xlu0 0
    %474 = vperm.xlu0 %473, %v263
    %v475 = vpop.permute.xlu0 %474
    %478 = vset.pattern.permute.xlu0 0
    %479 = vperm.xlu0 %478, %v264
    %v480 = vpop.permute.xlu0 %479
    %483 = vset.pattern.permute.xlu0 0
    %484 = vperm.xlu0 %483, %v265
    %v485 = vpop.permute.xlu0 %484
    %488 = vset.pattern.permute.xlu0 0
    %489 = vperm.xlu0 %488, %v266
    %v490 = vpop.permute.xlu0 %489
    %493 = vset.pattern.permute.xlu0 0
    %494 = vperm.xlu0 %493, %v267
    %v495 = vpop.permute.xlu0 %494
    %498 = vset.pattern.permute.xlu0 0
    %499 = vperm.xlu0 %498, %v268
    %v500 = vpop.permute.xlu0 %499
    %503 = vset.pattern.permute.xlu0 0
    %504 = vperm.xlu0 %503, %v269
    %v505 = vpop.permute.xlu0 %504
    %508 = vset.pattern.permute.xlu0 0
    %509 = vperm.xlu0 %508, %v270
    %v510 = vpop.permute.xlu0 %509
    %513 = vset.pattern.permute.xlu0 0
    %514 = vperm.xlu0 %513, %v271
    %v515 = vpop.permute.xlu0 %514
    %518 = vset.pattern.permute.xlu0 0
    %519 = vperm.xlu0 %518, %v272
    %v520 = vpop.permute.xlu0 %519
    %523 = vset.pattern.permute.xlu0 0
    %524 = vperm.xlu0 %523, %v273
    %v525 = vpop.permute.xlu0 %524
    %528 = vset.pattern.permute.xlu0 0
    %529 = vperm.xlu0 %528, %v274
    %v530 = vpop.permute.xlu0 %529
    %533 = vset.pattern.permute.xlu0 0
    %534 = vperm.xlu0 %533, %v275
    %v535 = vpop.permute.xlu0 %534
    %538 = vset.pattern.permute.xlu0 0
    %539 = vperm.xlu0 %538, %v276
    %v540 = vpop.permute.xlu0 %539
    %543 = vset.pattern.permute.xlu0 0
    %544 = vperm.xlu0 %543, %v277
    %v545 = vpop.permute.xlu0 %544
    %548 = vset.pattern.permute.xlu0 0
    %549 = vperm.xlu0 %548, %v278
    %v550 = vpop.permute.xlu0 %549
    %553 = vset.pattern.permute.xlu0 0
    %554 = vperm.xlu0 %553, %v279
    %v555 = vpop.permute.xlu0 %554
    %558 = vset.pattern.permute.xlu0 0
    %559 = vperm.xlu0 %558, %v280
    %v560 = vpop.permute.xlu0 %559
    %563 = vset.pattern.permute.xlu0 0
    %564 = vperm.xlu0 %563, %v281
    %v565 = vpop.permute.xlu0 %564
    %568 = vset.pattern.permute.xlu0 0
    %569 = vperm.xlu0 %568, %v282
    %v570 = vpop.permute.xlu0 %569
    %573 = vset.pattern.permute.xlu0 0
    %574 = vperm.xlu0 %573, %v283
    %v575 = vpop.permute.xlu0 %574
    %578 = vset.pattern.permute.xlu0 0
    %579 = vperm.xlu0 %578, %v284
    %v580 = vpop.permute.xlu0 %579
    %583 = vset.pattern.permute.xlu0 0
    %584 = vperm.xlu0 %583, %v285
    %v585 = vpop.permute.xlu0 %584
    %588 = vset.pattern.permute.xlu0 0
    %589 = vperm.xlu0 %588, %v286
    %v590 = vpop.permute.xlu0 %589
    %593 = vset.pattern.permute.xlu0 0
    %594 = vperm.xlu0 %593, %v287
    %v595 = vpop.permute.xlu0 %594
    %598 = vset.pattern.permute.xlu0 0
    %599 = vperm.xlu0 %598, %v288
    %v600 = vpop.permute.xlu0 %599
    %603 = vset.pattern.permute.xlu0 0
    %604 = vperm.xlu0 %603, %v289
    %v605 = vpop.permute.xlu0 %604
    %608 = vset.pattern.permute.xlu0 0
    %609 = vperm.xlu0 %608, %v290
    %v610 = vpop.permute.xlu0 %609
    %v612 = vlaneseq
    %v613 = vshrl.u32 %v612, 7
    %v614 = vsub.s32 0, %v613
    %v615 = vrot.slane %v291, %v614
    %v616 = vmul.f32 %v295, %v615
    %v617 = vmul.f32 %v300, %v615
    %v618 = vmul.f32 %v305, %v615
    %v619 = vmul.f32 %v310, %v615
    %v620 = vmul.f32 %v315, %v615
    %v621 = vmul.f32 %v320, %v615
    %v622 = vmul.f32 %v325, %v615
    %v623 = vmul.f32 %v330, %v615
    %v624 = vmul.f32 %v335, %v615
    %v625 = vmul.f32 %v340, %v615
    %v626 = vmul.f32 %v345, %v615
    %v627 = vmul.f32 %v350, %v615
    %v628 = vmul.f32 %v355, %v615
    %v629 = vmul.f32 %v360, %v615
    %v630 = vmul.f32 %v365, %v615
    %v631 = vmul.f32 %v370, %v615
    %v632 = vmul.f32 %v375, %v615
    %v633 = vmul.f32 %v380, %v615
    %v634 = vmul.f32 %v385, %v615
    %v635 = vmul.f32 %v390, %v615
    %v636 = vmul.f32 %v395, %v615
    %v637 = vmul.f32 %v400, %v615
    %v638 = vmul.f32 %v405, %v615
    %v639 = vmul.f32 %v410, %v615
    %v640 = vmul.f32 %v415, %v615
    %v641 = vmul.f32 %v420, %v615
    %v642 = vmul.f32 %v425, %v615
    %v643 = vmul.f32 %v430, %v615
    %v644 = vmul.f32 %v435, %v615
    %v645 = vmul.f32 %v440, %v615
    %v646 = vmul.f32 %v445, %v615
    %v647 = vmul.f32 %v450, %v615
    %v648 = vmul.f32 %v455, %v615
    %v649 = vmul.f32 %v460, %v615
    %v650 = vmul.f32 %v465, %v615
    %v651 = vmul.f32 %v470, %v615
    %v652 = vmul.f32 %v475, %v615
    %v653 = vmul.f32 %v480, %v615
    %v654 = vmul.f32 %v485, %v615
    %v655 = vmul.f32 %v490, %v615
    %v656 = vmul.f32 %v495, %v615
    %v657 = vmul.f32 %v500, %v615
    %v658 = vmul.f32 %v505, %v615
    %v659 = vmul.f32 %v510, %v615
    %v660 = vmul.f32 %v515, %v615
    %v661 = vmul.f32 %v520, %v615
    %v662 = vmul.f32 %v525, %v615
    %v663 = vmul.f32 %v530, %v615
    %v664 = vmul.f32 %v535, %v615
    %v665 = vmul.f32 %v540, %v615
    %v666 = vmul.f32 %v545, %v615
    %v667 = vmul.f32 %v550, %v615
    %v668 = vmul.f32 %v555, %v615
    %v669 = vmul.f32 %v560, %v615
    %v670 = vmul.f32 %v565, %v615
    %v671 = vmul.f32 %v570, %v615
    %v672 = vmul.f32 %v575, %v615
    %v673 = vmul.f32 %v580, %v615
    %v674 = vmul.f32 %v585, %v615
    %v675 = vmul.f32 %v590, %v615
    %v676 = vmul.f32 %v595, %v615
    %v677 = vmul.f32 %v600, %v615
    %v678 = vmul.f32 %v605, %v615
    %v679 = vmul.f32 %v610, %v615
    %v680 = vadd.f32 %v616, 0.0
    %v681 = vadd.f32 %v617, 0.0
    %v682 = vadd.f32 %v618, 0.0
    %v683 = vadd.f32 %v619, 0.0
    %v684 = vadd.f32 %v620, 0.0
    %v685 = vadd.f32 %v621, 0.0
    %v686 = vadd.f32 %v622, 0.0
    %v687 = vadd.f32 %v623, 0.0
    %v688 = vadd.f32 %v624, 0.0
    %v689 = vadd.f32 %v625, 0.0
    %v690 = vadd.f32 %v626, 0.0
    %v691 = vadd.f32 %v627, 0.0
    %v692 = vadd.f32 %v628, 0.0
    %v693 = vadd.f32 %v629, 0.0
    %v694 = vadd.f32 %v630, 0.0
    %v695 = vadd.f32 %v631, 0.0
    %v696 = vadd.f32 %v632, 0.0
    %v697 = vadd.f32 %v633, 0.0
    %v698 = vadd.f32 %v634, 0.0
    %v699 = vadd.f32 %v635, 0.0
    %v700 = vadd.f32 %v636, 0.0
    %v701 = vadd.f32 %v637, 0.0
    %v702 = vadd.f32 %v638, 0.0
    %v703 = vadd.f32 %v639, 0.0
    %v704 = vadd.f32 %v640, 0.0
    %v705 = vadd.f32 %v641, 0.0
    %v706 = vadd.f32 %v642, 0.0
    %v707 = vadd.f32 %v643, 0.0
    %v708 = vadd.f32 %v644, 0.0
    %v709 = vadd.f32 %v645, 0.0
    %v710 = vadd.f32 %v646, 0.0
    %v711 = vadd.f32 %v647, 0.0
    %v712 = vadd.f32 %v648, 0.0
    %v713 = vadd.f32 %v649, 0.0
    %v714 = vadd.f32 %v650, 0.0
    %v715 = vadd.f32 %v651, 0.0
    %v716 = vadd.f32 %v652, 0.0
    %v717 = vadd.f32 %v653, 0.0
    %v718 = vadd.f32 %v654, 0.0
    %v719 = vadd.f32 %v655, 0.0
    %v720 = vadd.f32 %v656, 0.0
    %v721 = vadd.f32 %v657, 0.0
    %v722 = vadd.f32 %v658, 0.0
    %v723 = vadd.f32 %v659, 0.0
    %v724 = vadd.f32 %v660, 0.0
    %v725 = vadd.f32 %v661, 0.0
    %v726 = vadd.f32 %v662, 0.0
    %v727 = vadd.f32 %v663, 0.0
    %v728 = vadd.f32 %v664, 0.0
    %v729 = vadd.f32 %v665, 0.0
    %v730 = vadd.f32 %v666, 0.0
    %v731 = vadd.f32 %v667, 0.0
    %v732 = vadd.f32 %v668, 0.0
    %v733 = vadd.f32 %v669, 0.0
    %v734 = vadd.f32 %v670, 0.0
    %v735 = vadd.f32 %v671, 0.0
    %v736 = vadd.f32 %v672, 0.0
    %v737 = vadd.f32 %v673, 0.0
    %v738 = vadd.f32 %v674, 0.0
    %v739 = vadd.f32 %v675, 0.0
    %v740 = vadd.f32 %v676, 0.0
    %v741 = vadd.f32 %v677, 0.0
    %v742 = vadd.f32 %v678, 0.0
    %v743 = vadd.f32 %v679, 0.0
    %v744 = vld [vmem:[%s3 + $0x1] sm:$0x1]
    %745 = vset.pattern.permute.xlu0 1
    %746 = vperm.xlu0 %745, %v227
    %v747 = vpop.permute.xlu0 %746
    %749 = vset.pattern.permute.xlu0 1
    %750 = vperm.xlu0 %749, %v228
    %v751 = vpop.permute.xlu0 %750
    %753 = vset.pattern.permute.xlu0 1
    %754 = vperm.xlu0 %753, %v229
    %v755 = vpop.permute.xlu0 %754
    %757 = vset.pattern.permute.xlu0 1
    %758 = vperm.xlu0 %757, %v230
    %v759 = vpop.permute.xlu0 %758
    %761 = vset.pattern.permute.xlu0 1
    %762 = vperm.xlu0 %761, %v231
    %v763 = vpop.permute.xlu0 %762
    %765 = vset.pattern.permute.xlu0 1
    %766 = vperm.xlu0 %765, %v232
    %v767 = vpop.permute.xlu0 %766
    %769 = vset.pattern.permute.xlu0 1
    %770 = vperm.xlu0 %769, %v233
    %v771 = vpop.permute.xlu0 %770
    %773 = vset.pattern.permute.xlu0 1
    %774 = vperm.xlu0 %773, %v234
    %v775 = vpop.permute.xlu0 %774
    %777 = vset.pattern.permute.xlu0 1
    %778 = vperm.xlu0 %777, %v235
    %v779 = vpop.permute.xlu0 %778
    %781 = vset.pattern.permute.xlu0 1
    %782 = vperm.xlu0 %781, %v236
    %v783 = vpop.permute.xlu0 %782
    %785 = vset.pattern.permute.xlu0 1
    %786 = vperm.xlu0 %785, %v237
    %v787 = vpop.permute.xlu0 %786
    %789 = vset.pattern.permute.xlu0 1
    %790 = vperm.xlu0 %789, %v238
    %v791 = vpop.permute.xlu0 %790
    %793 = vset.pattern.permute.xlu0 1
    %794 = vperm.xlu0 %793, %v239
    %v795 = vpop.permute.xlu0 %794
    %797 = vset.pattern.permute.xlu0 1
    %798 = vperm.xlu0 %797, %v240
    %v799 = vpop.permute.xlu0 %798
    %801 = vset.pattern.permute.xlu0 1
    %802 = vperm.xlu0 %801, %v241
    %v803 = vpop.permute.xlu0 %802
    %805 = vset.pattern.permute.xlu0 1
    %806 = vperm.xlu0 %805, %v242
    %v807 = vpop.permute.xlu0 %806
    %809 = vset.pattern.permute.xlu0 1
    %810 = vperm.xlu0 %809, %v243
    %v811 = vpop.permute.xlu0 %810
    %813 = vset.pattern.permute.xlu0 1
    %814 = vperm.xlu0 %813, %v244
    %v815 = vpop.permute.xlu0 %814
    %817 = vset.pattern.permute.xlu0 1
    %818 = vperm.xlu0 %817, %v245
    %v819 = vpop.permute.xlu0 %818
    %821 = vset.pattern.permute.xlu0 1
    %822 = vperm.xlu0 %821, %v246
    %v823 = vpop.permute.xlu0 %822
    %825 = vset.pattern.permute.xlu0 1
    %826 = vperm.xlu0 %825, %v247
    %v827 = vpop.permute.xlu0 %826
    %829 = vset.pattern.permute.xlu0 1
    %830 = vperm.xlu0 %829, %v248
    %v831 = vpop.permute.xlu0 %830
    %833 = vset.pattern.permute.xlu0 1
    %834 = vperm.xlu0 %833, %v249
    %v835 = vpop.permute.xlu0 %834
    %837 = vset.pattern.permute.xlu0 1
    %838 = vperm.xlu0 %837, %v250
    %v839 = vpop.permute.xlu0 %838
    %841 = vset.pattern.permute.xlu0 1
    %842 = vperm.xlu0 %841, %v251
    %v843 = vpop.permute.xlu0 %842
    %845 = vset.pattern.permute.xlu0 1
    %846 = vperm.xlu0 %845, %v252
    %v847 = vpop.permute.xlu0 %846
    %849 = vset.pattern.permute.xlu0 1
    %850 = vperm.xlu0 %849, %v253
    %v851 = vpop.permute.xlu0 %850
    %853 = vset.pattern.permute.xlu0 1
    %854 = vperm.xlu0 %853, %v254
    %v855 = vpop.permute.xlu0 %854
    %857 = vset.pattern.permute.xlu0 1
    %858 = vperm.xlu0 %857, %v255
    %v859 = vpop.permute.xlu0 %858
    %861 = vset.pattern.permute.xlu0 1
    %862 = vperm.xlu0 %861, %v256
    %v863 = vpop.permute.xlu0 %862
    %865 = vset.pattern.permute.xlu0 1
    %866 = vperm.xlu0 %865, %v257
    %v867 = vpop.permute.xlu0 %866
    %869 = vset.pattern.permute.xlu0 1
    %870 = vperm.xlu0 %869, %v258
    %v871 = vpop.permute.xlu0 %870
    %873 = vset.pattern.permute.xlu0 1
    %874 = vperm.xlu0 %873, %v259
    %v875 = vpop.permute.xlu0 %874
    %877 = vset.pattern.permute.xlu0 1
    %878 = vperm.xlu0 %877, %v260
    %v879 = vpop.permute.xlu0 %878
    %881 = vset.pattern.permute.xlu0 1
    %882 = vperm.xlu0 %881, %v261
    %v883 = vpop.permute.xlu0 %882
    %885 = vset.pattern.permute.xlu0 1
    %886 = vperm.xlu0 %885, %v262
    %v887 = vpop.permute.xlu0 %886
    %889 = vset.pattern.permute.xlu0 1
    %890 = vperm.xlu0 %889, %v263
    %v891 = vpop.permute.xlu0 %890
    %893 = vset.pattern.permute.xlu0 1
    %894 = vperm.xlu0 %893, %v264
    %v895 = vpop.permute.xlu0 %894
    %897 = vset.pattern.permute.xlu0 1
    %898 = vperm.xlu0 %897, %v265
    %v899 = vpop.permute.xlu0 %898
    %901 = vset.pattern.permute.xlu0 1
    %902 = vperm.xlu0 %901, %v266
    %v903 = vpop.permute.xlu0 %902
    %905 = vset.pattern.permute.xlu0 1
    %906 = vperm.xlu0 %905, %v267
    %v907 = vpop.permute.xlu0 %906
    %909 = vset.pattern.permute.xlu0 1
    %910 = vperm.xlu0 %909, %v268
    %v911 = vpop.permute.xlu0 %910
    %913 = vset.pattern.permute.xlu0 1
    %914 = vperm.xlu0 %913, %v269
    %v915 = vpop.permute.xlu0 %914
    %917 = vset.pattern.permute.xlu0 1
    %918 = vperm.xlu0 %917, %v270
    %v919 = vpop.permute.xlu0 %918
    %921 = vset.pattern.permute.xlu0 1
    %922 = vperm.xlu0 %921, %v271
    %v923 = vpop.permute.xlu0 %922
    %925 = vset.pattern.permute.xlu0 1
    %926 = vperm.xlu0 %925, %v272
    %v927 = vpop.permute.xlu0 %926
    %929 = vset.pattern.permute.xlu0 1
    %930 = vperm.xlu0 %929, %v273
    %v931 = vpop.permute.xlu0 %930
    %933 = vset.pattern.permute.xlu0 1
    %934 = vperm.xlu0 %933, %v274
    %v935 = vpop.permute.xlu0 %934
    %937 = vset.pattern.permute.xlu0 1
    %938 = vperm.xlu0 %937, %v275
    %v939 = vpop.permute.xlu0 %938
    %941 = vset.pattern.permute.xlu0 1
    %942 = vperm.xlu0 %941, %v276
    %v943 = vpop.permute.xlu0 %942
    %945 = vset.pattern.permute.xlu0 1
    %946 = vperm.xlu0 %945, %v277
    %v947 = vpop.permute.xlu0 %946
    %949 = vset.pattern.permute.xlu0 1
    %950 = vperm.xlu0 %949, %v278
    %v951 = vpop.permute.xlu0 %950
    %953 = vset.pattern.permute.xlu0 1
    %954 = vperm.xlu0 %953, %v279
    %v955 = vpop.permute.xlu0 %954
    %957 = vset.pattern.permute.xlu0 1
    %958 = vperm.xlu0 %957, %v280
    %v959 = vpop.permute.xlu0 %958
    %961 = vset.pattern.permute.xlu0 1
    %962 = vperm.xlu0 %961, %v281
    %v963 = vpop.permute.xlu0 %962
    %965 = vset.pattern.permute.xlu0 1
    %966 = vperm.xlu0 %965, %v282
    %v967 = vpop.permute.xlu0 %966
    %969 = vset.pattern.permute.xlu0 1
    %970 = vperm.xlu0 %969, %v283
    %v971 = vpop.permute.xlu0 %970
    %973 = vset.pattern.permute.xlu0 1
    %974 = vperm.xlu0 %973, %v284
    %v975 = vpop.permute.xlu0 %974
    %977 = vset.pattern.permute.xlu0 1
    %978 = vperm.xlu0 %977, %v285
    %v979 = vpop.permute.xlu0 %978
    %981 = vset.pattern.permute.xlu0 1
    %982 = vperm.xlu0 %981, %v286
    %v983 = vpop.permute.xlu0 %982
    %985 = vset.pattern.permute.xlu0 1
    %986 = vperm.xlu0 %985, %v287
    %v987 = vpop.permute.xlu0 %986
    %989 = vset.pattern.permute.xlu0 1
    %990 = vperm.xlu0 %989, %v288
    %v991 = vpop.permute.xlu0 %990
    %993 = vset.pattern.permute.xlu0 1
    %994 = vperm.xlu0 %993, %v289
    %v995 = vpop.permute.xlu0 %994
    %997 = vset.pattern.permute.xlu0 1
    %998 = vperm.xlu0 %997, %v290
    %v999 = vpop.permute.xlu0 %998
    %v1001 = vlaneseq
    %v1002 = vshrl.u32 %v1001, 7
    %v1003 = vsub.s32 0, %v1002
    %v1004 = vrot.slane %v744, %v1003
    %v1005 = vmul.f32 %v747, %v1004
    %v1006 = vmul.f32 %v751, %v1004
    %v1007 = vmul.f32 %v755, %v1004
    %v1008 = vmul.f32 %v759, %v1004
    %v1009 = vmul.f32 %v763, %v1004
    %v1010 = vmul.f32 %v767, %v1004
    %v1011 = vmul.f32 %v771, %v1004
    %v1012 = vmul.f32 %v775, %v1004
    %v1013 = vmul.f32 %v779, %v1004
    %v1014 = vmul.f32 %v783, %v1004
    %v1015 = vmul.f32 %v787, %v1004
    %v1016 = vmul.f32 %v791, %v1004
    %v1017 = vmul.f32 %v795, %v1004
    %v1018 = vmul.f32 %v799, %v1004
    %v1019 = vmul.f32 %v803, %v1004
    %v1020 = vmul.f32 %v807, %v1004
    %v1021 = vmul.f32 %v811, %v1004
    %v1022 = vmul.f32 %v815, %v1004
    %v1023 = vmul.f32 %v819, %v1004
    %v1024 = vmul.f32 %v823, %v1004
    %v1025 = vmul.f32 %v827, %v1004
    %v1026 = vmul.f32 %v831, %v1004
    %v1027 = vmul.f32 %v835, %v1004
    %v1028 = vmul.f32 %v839, %v1004
    %v1029 = vmul.f32 %v843, %v1004
    %v1030 = vmul.f32 %v847, %v1004
    %v1031 = vmul.f32 %v851, %v1004
    %v1032 = vmul.f32 %v855, %v1004
    %v1033 = vmul.f32 %v859, %v1004
    %v1034 = vmul.f32 %v863, %v1004
    %v1035 = vmul.f32 %v867, %v1004
    %v1036 = vmul.f32 %v871, %v1004
    %v1037 = vmul.f32 %v875, %v1004
    %v1038 = vmul.f32 %v879, %v1004
    %v1039 = vmul.f32 %v883, %v1004
    %v1040 = vmul.f32 %v887, %v1004
    %v1041 = vmul.f32 %v891, %v1004
    %v1042 = vmul.f32 %v895, %v1004
    %v1043 = vmul.f32 %v899, %v1004
    %v1044 = vmul.f32 %v903, %v1004
    %v1045 = vmul.f32 %v907, %v1004
    %v1046 = vmul.f32 %v911, %v1004
    %v1047 = vmul.f32 %v915, %v1004
    %v1048 = vmul.f32 %v919, %v1004
    %v1049 = vmul.f32 %v923, %v1004
    %v1050 = vmul.f32 %v927, %v1004
    %v1051 = vmul.f32 %v931, %v1004
    %v1052 = vmul.f32 %v935, %v1004
    %v1053 = vmul.f32 %v939, %v1004
    %v1054 = vmul.f32 %v943, %v1004
    %v1055 = vmul.f32 %v947, %v1004
    %v1056 = vmul.f32 %v951, %v1004
    %v1057 = vmul.f32 %v955, %v1004
    %v1058 = vmul.f32 %v959, %v1004
    %v1059 = vmul.f32 %v963, %v1004
    %v1060 = vmul.f32 %v967, %v1004
    %v1061 = vmul.f32 %v971, %v1004
    %v1062 = vmul.f32 %v975, %v1004
    %v1063 = vmul.f32 %v979, %v1004
    %v1064 = vmul.f32 %v983, %v1004
    %v1065 = vmul.f32 %v987, %v1004
    %v1066 = vmul.f32 %v991, %v1004
    %v1067 = vmul.f32 %v995, %v1004
    %v1068 = vmul.f32 %v999, %v1004
    %v1069 = vadd.f32 %v680, %v1005
    %v1070 = vadd.f32 %v681, %v1006
    %v1071 = vadd.f32 %v682, %v1007
    %v1072 = vadd.f32 %v683, %v1008
    %v1073 = vadd.f32 %v684, %v1009
    %v1074 = vadd.f32 %v685, %v1010
    %v1075 = vadd.f32 %v686, %v1011
    %v1076 = vadd.f32 %v687, %v1012
    %v1077 = vadd.f32 %v688, %v1013
    %v1078 = vadd.f32 %v689, %v1014
    %v1079 = vadd.f32 %v690, %v1015
    %v1080 = vadd.f32 %v691, %v1016
    %v1081 = vadd.f32 %v692, %v1017
    %v1082 = vadd.f32 %v693, %v1018
    %v1083 = vadd.f32 %v694, %v1019
    %v1084 = vadd.f32 %v695, %v1020
    %v1085 = vadd.f32 %v696, %v1021
    %v1086 = vadd.f32 %v697, %v1022
    %v1087 = vadd.f32 %v698, %v1023
    %v1088 = vadd.f32 %v699, %v1024
    %v1089 = vadd.f32 %v700, %v1025
    %v1090 = vadd.f32 %v701, %v1026
    %v1091 = vadd.f32 %v702, %v1027
    %v1092 = vadd.f32 %v703, %v1028
    %v1093 = vadd.f32 %v704, %v1029
    %v1094 = vadd.f32 %v705, %v1030
    %v1095 = vadd.f32 %v706, %v1031
    %v1096 = vadd.f32 %v707, %v1032
    %v1097 = vadd.f32 %v708, %v1033
    %v1098 = vadd.f32 %v709, %v1034
    %v1099 = vadd.f32 %v710, %v1035
    %v1100 = vadd.f32 %v711, %v1036
    %v1101 = vadd.f32 %v712, %v1037
    %v1102 = vadd.f32 %v713, %v1038
    %v1103 = vadd.f32 %v714, %v1039
    %v1104 = vadd.f32 %v715, %v1040
    %v1105 = vadd.f32 %v716, %v1041
    %v1106 = vadd.f32 %v717, %v1042
    %v1107 = vadd.f32 %v718, %v1043
    %v1108 = vadd.f32 %v719, %v1044
    %v1109 = vadd.f32 %v720, %v1045
    %v1110 = vadd.f32 %v721, %v1046
    %v1111 = vadd.f32 %v722, %v1047
    %v1112 = vadd.f32 %v723, %v1048
    %v1113 = vadd.f32 %v724, %v1049
    %v1114 = vadd.f32 %v725, %v1050
    %v1115 = vadd.f32 %v726, %v1051
    %v1116 = vadd.f32 %v727, %v1052
    %v1117 = vadd.f32 %v728, %v1053
    %v1118 = vadd.f32 %v729, %v1054
    %v1119 = vadd.f32 %v730, %v1055
    %v1120 = vadd.f32 %v731, %v1056
    %v1121 = vadd.f32 %v732, %v1057
    %v1122 = vadd.f32 %v733, %v1058
    %v1123 = vadd.f32 %v734, %v1059
    %v1124 = vadd.f32 %v735, %v1060
    %v1125 = vadd.f32 %v736, %v1061
    %v1126 = vadd.f32 %v737, %v1062
    %v1127 = vadd.f32 %v738, %v1063
    %v1128 = vadd.f32 %v739, %v1064
    %v1129 = vadd.f32 %v740, %v1065
    %v1130 = vadd.f32 %v741, %v1066
    %v1131 = vadd.f32 %v742, %v1067
    %v1132 = vadd.f32 %v743, %v1068
    %v1133 = vld [vmem:[%s3 + $0x2] sm:$0x1]
    %1134 = vset.pattern.permute.xlu0 2
    %1135 = vperm.xlu0 %1134, %v227
    %v1136 = vpop.permute.xlu0 %1135
    %1138 = vset.pattern.permute.xlu0 2
    %1139 = vperm.xlu0 %1138, %v228
    %v1140 = vpop.permute.xlu0 %1139
    %1142 = vset.pattern.permute.xlu0 2
    %1143 = vperm.xlu0 %1142, %v229
    %v1144 = vpop.permute.xlu0 %1143
    %1146 = vset.pattern.permute.xlu0 2
    %1147 = vperm.xlu0 %1146, %v230
    %v1148 = vpop.permute.xlu0 %1147
    %1150 = vset.pattern.permute.xlu0 2
    %1151 = vperm.xlu0 %1150, %v231
    %v1152 = vpop.permute.xlu0 %1151
    %1154 = vset.pattern.permute.xlu0 2
    %1155 = vperm.xlu0 %1154, %v232
    %v1156 = vpop.permute.xlu0 %1155
    %1158 = vset.pattern.permute.xlu0 2
    %1159 = vperm.xlu0 %1158, %v233
    %v1160 = vpop.permute.xlu0 %1159
    %1162 = vset.pattern.permute.xlu0 2
    %1163 = vperm.xlu0 %1162, %v234
    %v1164 = vpop.permute.xlu0 %1163
    %1166 = vset.pattern.permute.xlu0 2
    %1167 = vperm.xlu0 %1166, %v235
    %v1168 = vpop.permute.xlu0 %1167
    %1170 = vset.pattern.permute.xlu0 2
    %1171 = vperm.xlu0 %1170, %v236
    %v1172 = vpop.permute.xlu0 %1171
    %1174 = vset.pattern.permute.xlu0 2
    %1175 = vperm.xlu0 %1174, %v237
    %v1176 = vpop.permute.xlu0 %1175
    %1178 = vset.pattern.permute.xlu0 2
    %1179 = vperm.xlu0 %1178, %v238
    %v1180 = vpop.permute.xlu0 %1179
    %1182 = vset.pattern.permute.xlu0 2
    %1183 = vperm.xlu0 %1182, %v239
    %v1184 = vpop.permute.xlu0 %1183
    %1186 = vset.pattern.permute.xlu0 2
    %1187 = vperm.xlu0 %1186, %v240
    %v1188 = vpop.permute.xlu0 %1187
    %1190 = vset.pattern.permute.xlu0 2
    %1191 = vperm.xlu0 %1190, %v241
    %v1192 = vpop.permute.xlu0 %1191
    %1194 = vset.pattern.permute.xlu0 2
    %1195 = vperm.xlu0 %1194, %v242
    %v1196 = vpop.permute.xlu0 %1195
    %1198 = vset.pattern.permute.xlu0 2
    %1199 = vperm.xlu0 %1198, %v243
    %v1200 = vpop.permute.xlu0 %1199
    %1202 = vset.pattern.permute.xlu0 2
    %1203 = vperm.xlu0 %1202, %v244
    %v1204 = vpop.permute.xlu0 %1203
    %1206 = vset.pattern.permute.xlu0 2
    %1207 = vperm.xlu0 %1206, %v245
    %v1208 = vpop.permute.xlu0 %1207
    %1210 = vset.pattern.permute.xlu0 2
    %1211 = vperm.xlu0 %1210, %v246
    %v1212 = vpop.permute.xlu0 %1211
    %1214 = vset.pattern.permute.xlu0 2
    %1215 = vperm.xlu0 %1214, %v247
    %v1216 = vpop.permute.xlu0 %1215
    %1218 = vset.pattern.permute.xlu0 2
    %1219 = vperm.xlu0 %1218, %v248
    %v1220 = vpop.permute.xlu0 %1219
    %1222 = vset.pattern.permute.xlu0 2
    %1223 = vperm.xlu0 %1222, %v249
    %v1224 = vpop.permute.xlu0 %1223
    %1226 = vset.pattern.permute.xlu0 2
    %1227 = vperm.xlu0 %1226, %v250
    %v1228 = vpop.permute.xlu0 %1227
    %1230 = vset.pattern.permute.xlu0 2
    %1231 = vperm.xlu0 %1230, %v251
    %v1232 = vpop.permute.xlu0 %1231
    %1234 = vset.pattern.permute.xlu0 2
    %1235 = vperm.xlu0 %1234, %v252
    %v1236 = vpop.permute.xlu0 %1235
    %1238 = vset.pattern.permute.xlu0 2
    %1239 = vperm.xlu0 %1238, %v253
    %v1240 = vpop.permute.xlu0 %1239
    %1242 = vset.pattern.permute.xlu0 2
    %1243 = vperm.xlu0 %1242, %v254
    %v1244 = vpop.permute.xlu0 %1243
    %1246 = vset.pattern.permute.xlu0 2
    %1247 = vperm.xlu0 %1246, %v255
    %v1248 = vpop.permute.xlu0 %1247
    %1250 = vset.pattern.permute.xlu0 2
    %1251 = vperm.xlu0 %1250, %v256
    %v1252 = vpop.permute.xlu0 %1251
    %1254 = vset.pattern.permute.xlu0 2
    %1255 = vperm.xlu0 %1254, %v257
    %v1256 = vpop.permute.xlu0 %1255
    %1258 = vset.pattern.permute.xlu0 2
    %1259 = vperm.xlu0 %1258, %v258
    %v1260 = vpop.permute.xlu0 %1259
    %1262 = vset.pattern.permute.xlu0 2
    %1263 = vperm.xlu0 %1262, %v259
    %v1264 = vpop.permute.xlu0 %1263
    %1266 = vset.pattern.permute.xlu0 2
    %1267 = vperm.xlu0 %1266, %v260
    %v1268 = vpop.permute.xlu0 %1267
    %1270 = vset.pattern.permute.xlu0 2
    %1271 = vperm.xlu0 %1270, %v261
    %v1272 = vpop.permute.xlu0 %1271
    %1274 = vset.pattern.permute.xlu0 2
    %1275 = vperm.xlu0 %1274, %v262
    %v1276 = vpop.permute.xlu0 %1275
    %1278 = vset.pattern.permute.xlu0 2
    %1279 = vperm.xlu0 %1278, %v263
    %v1280 = vpop.permute.xlu0 %1279
    %1282 = vset.pattern.permute.xlu0 2
    %1283 = vperm.xlu0 %1282, %v264
    %v1284 = vpop.permute.xlu0 %1283
    %1286 = vset.pattern.permute.xlu0 2
    %1287 = vperm.xlu0 %1286, %v265
    %v1288 = vpop.permute.xlu0 %1287
    %1290 = vset.pattern.permute.xlu0 2
    %1291 = vperm.xlu0 %1290, %v266
    %v1292 = vpop.permute.xlu0 %1291
    %1294 = vset.pattern.permute.xlu0 2
    %1295 = vperm.xlu0 %1294, %v267
    %v1296 = vpop.permute.xlu0 %1295
    %1298 = vset.pattern.permute.xlu0 2
    %1299 = vperm.xlu0 %1298, %v268
    %v1300 = vpop.permute.xlu0 %1299
    %1302 = vset.pattern.permute.xlu0 2
    %1303 = vperm.xlu0 %1302, %v269
    %v1304 = vpop.permute.xlu0 %1303
    %1306 = vset.pattern.permute.xlu0 2
    %1307 = vperm.xlu0 %1306, %v270
    %v1308 = vpop.permute.xlu0 %1307
    %1310 = vset.pattern.permute.xlu0 2
    %1311 = vperm.xlu0 %1310, %v271
    %v1312 = vpop.permute.xlu0 %1311
    %1314 = vset.pattern.permute.xlu0 2
    %1315 = vperm.xlu0 %1314, %v272
    %v1316 = vpop.permute.xlu0 %1315
    %1318 = vset.pattern.permute.xlu0 2
    %1319 = vperm.xlu0 %1318, %v273
    %v1320 = vpop.permute.xlu0 %1319
    %1322 = vset.pattern.permute.xlu0 2
    %1323 = vperm.xlu0 %1322, %v274
    %v1324 = vpop.permute.xlu0 %1323
    %1326 = vset.pattern.permute.xlu0 2
    %1327 = vperm.xlu0 %1326, %v275
    %v1328 = vpop.permute.xlu0 %1327
    %1330 = vset.pattern.permute.xlu0 2
    %1331 = vperm.xlu0 %1330, %v276
    %v1332 = vpop.permute.xlu0 %1331
    %1334 = vset.pattern.permute.xlu0 2
    %1335 = vperm.xlu0 %1334, %v277
    %v1336 = vpop.permute.xlu0 %1335
    %1338 = vset.pattern.permute.xlu0 2
    %1339 = vperm.xlu0 %1338, %v278
    %v1340 = vpop.permute.xlu0 %1339
    %1342 = vset.pattern.permute.xlu0 2
    %1343 = vperm.xlu0 %1342, %v279
    %v1344 = vpop.permute.xlu0 %1343
    %1346 = vset.pattern.permute.xlu0 2
    %1347 = vperm.xlu0 %1346, %v280
    %v1348 = vpop.permute.xlu0 %1347
    %1350 = vset.pattern.permute.xlu0 2
    %1351 = vperm.xlu0 %1350, %v281
    %v1352 = vpop.permute.xlu0 %1351
    %1354 = vset.pattern.permute.xlu0 2
    %1355 = vperm.xlu0 %1354, %v282
    %v1356 = vpop.permute.xlu0 %1355
    %1358 = vset.pattern.permute.xlu0 2
    %1359 = vperm.xlu0 %1358, %v283
    %v1360 = vpop.permute.xlu0 %1359
    %1362 = vset.pattern.permute.xlu0 2
    %1363 = vperm.xlu0 %1362, %v284
    %v1364 = vpop.permute.xlu0 %1363
    %1366 = vset.pattern.permute.xlu0 2
    %1367 = vperm.xlu0 %1366, %v285
    %v1368 = vpop.permute.xlu0 %1367
    %1370 = vset.pattern.permute.xlu0 2
    %1371 = vperm.xlu0 %1370, %v286
    %v1372 = vpop.permute.xlu0 %1371
    %1374 = vset.pattern.permute.xlu0 2
    %1375 = vperm.xlu0 %1374, %v287
    %v1376 = vpop.permute.xlu0 %1375
    %1378 = vset.pattern.permute.xlu0 2
    %1379 = vperm.xlu0 %1378, %v288
    %v1380 = vpop.permute.xlu0 %1379
    %1382 = vset.pattern.permute.xlu0 2
    %1383 = vperm.xlu0 %1382, %v289
    %v1384 = vpop.permute.xlu0 %1383
    %1386 = vset.pattern.permute.xlu0 2
    %1387 = vperm.xlu0 %1386, %v290
    %v1388 = vpop.permute.xlu0 %1387
    %v1390 = vlaneseq
    %v1391 = vshrl.u32 %v1390, 7
    %v1392 = vsub.s32 0, %v1391
    %v1393 = vrot.slane %v1133, %v1392
    %v1394 = vmul.f32 %v1136, %v1393
    %v1395 = vmul.f32 %v1140, %v1393
    %v1396 = vmul.f32 %v1144, %v1393
    %v1397 = vmul.f32 %v1148, %v1393
    %v1398 = vmul.f32 %v1152, %v1393
    %v1399 = vmul.f32 %v1156, %v1393
    %v1400 = vmul.f32 %v1160, %v1393
    %v1401 = vmul.f32 %v1164, %v1393
    %v1402 = vmul.f32 %v1168, %v1393
    %v1403 = vmul.f32 %v1172, %v1393
    %v1404 = vmul.f32 %v1176, %v1393
    %v1405 = vmul.f32 %v1180, %v1393
    %v1406 = vmul.f32 %v1184, %v1393
    %v1407 = vmul.f32 %v1188, %v1393
    %v1408 = vmul.f32 %v1192, %v1393
    %v1409 = vmul.f32 %v1196, %v1393
    %v1410 = vmul.f32 %v1200, %v1393
    %v1411 = vmul.f32 %v1204, %v1393
    %v1412 = vmul.f32 %v1208, %v1393
    %v1413 = vmul.f32 %v1212, %v1393
    %v1414 = vmul.f32 %v1216, %v1393
    %v1415 = vmul.f32 %v1220, %v1393
    %v1416 = vmul.f32 %v1224, %v1393
    %v1417 = vmul.f32 %v1228, %v1393
    %v1418 = vmul.f32 %v1232, %v1393
    %v1419 = vmul.f32 %v1236, %v1393
    %v1420 = vmul.f32 %v1240, %v1393
    %v1421 = vmul.f32 %v1244, %v1393
    %v1422 = vmul.f32 %v1248, %v1393
    %v1423 = vmul.f32 %v1252, %v1393
    %v1424 = vmul.f32 %v1256, %v1393
    %v1425 = vmul.f32 %v1260, %v1393
    %v1426 = vmul.f32 %v1264, %v1393
    %v1427 = vmul.f32 %v1268, %v1393
    %v1428 = vmul.f32 %v1272, %v1393
    %v1429 = vmul.f32 %v1276, %v1393
    %v1430 = vmul.f32 %v1280, %v1393
    %v1431 = vmul.f32 %v1284, %v1393
    %v1432 = vmul.f32 %v1288, %v1393
    %v1433 = vmul.f32 %v1292, %v1393
    %v1434 = vmul.f32 %v1296, %v1393
    %v1435 = vmul.f32 %v1300, %v1393
    %v1436 = vmul.f32 %v1304, %v1393
    %v1437 = vmul.f32 %v1308, %v1393
    %v1438 = vmul.f32 %v1312, %v1393
    %v1439 = vmul.f32 %v1316, %v1393
    %v1440 = vmul.f32 %v1320, %v1393
    %v1441 = vmul.f32 %v1324, %v1393
    %v1442 = vmul.f32 %v1328, %v1393
    %v1443 = vmul.f32 %v1332, %v1393
    %v1444 = vmul.f32 %v1336, %v1393
    %v1445 = vmul.f32 %v1340, %v1393
    %v1446 = vmul.f32 %v1344, %v1393
    %v1447 = vmul.f32 %v1348, %v1393
    %v1448 = vmul.f32 %v1352, %v1393
    %v1449 = vmul.f32 %v1356, %v1393
    %v1450 = vmul.f32 %v1360, %v1393
    %v1451 = vmul.f32 %v1364, %v1393
    %v1452 = vmul.f32 %v1368, %v1393
    %v1453 = vmul.f32 %v1372, %v1393
    %v1454 = vmul.f32 %v1376, %v1393
    %v1455 = vmul.f32 %v1380, %v1393
    %v1456 = vmul.f32 %v1384, %v1393
    %v1457 = vmul.f32 %v1388, %v1393
    %v1458 = vadd.f32 %v1069, %v1394
    %v1459 = vadd.f32 %v1070, %v1395
    %v1460 = vadd.f32 %v1071, %v1396
    %v1461 = vadd.f32 %v1072, %v1397
    %v1462 = vadd.f32 %v1073, %v1398
    %v1463 = vadd.f32 %v1074, %v1399
    %v1464 = vadd.f32 %v1075, %v1400
    %v1465 = vadd.f32 %v1076, %v1401
    %v1466 = vadd.f32 %v1077, %v1402
    %v1467 = vadd.f32 %v1078, %v1403
    %v1468 = vadd.f32 %v1079, %v1404
    %v1469 = vadd.f32 %v1080, %v1405
    %v1470 = vadd.f32 %v1081, %v1406
    %v1471 = vadd.f32 %v1082, %v1407
    %v1472 = vadd.f32 %v1083, %v1408
    %v1473 = vadd.f32 %v1084, %v1409
    %v1474 = vadd.f32 %v1085, %v1410
    %v1475 = vadd.f32 %v1086, %v1411
    %v1476 = vadd.f32 %v1087, %v1412
    %v1477 = vadd.f32 %v1088, %v1413
    %v1478 = vadd.f32 %v1089, %v1414
    %v1479 = vadd.f32 %v1090, %v1415
    %v1480 = vadd.f32 %v1091, %v1416
    %v1481 = vadd.f32 %v1092, %v1417
    %v1482 = vadd.f32 %v1093, %v1418
    %v1483 = vadd.f32 %v1094, %v1419
    %v1484 = vadd.f32 %v1095, %v1420
    %v1485 = vadd.f32 %v1096, %v1421
    %v1486 = vadd.f32 %v1097, %v1422
    %v1487 = vadd.f32 %v1098, %v1423
    %v1488 = vadd.f32 %v1099, %v1424
    %v1489 = vadd.f32 %v1100, %v1425
    %v1490 = vadd.f32 %v1101, %v1426
    %v1491 = vadd.f32 %v1102, %v1427
    %v1492 = vadd.f32 %v1103, %v1428
    %v1493 = vadd.f32 %v1104, %v1429
    %v1494 = vadd.f32 %v1105, %v1430
    %v1495 = vadd.f32 %v1106, %v1431
    %v1496 = vadd.f32 %v1107, %v1432
    %v1497 = vadd.f32 %v1108, %v1433
    %v1498 = vadd.f32 %v1109, %v1434
    %v1499 = vadd.f32 %v1110, %v1435
    %v1500 = vadd.f32 %v1111, %v1436
    %v1501 = vadd.f32 %v1112, %v1437
    %v1502 = vadd.f32 %v1113, %v1438
    %v1503 = vadd.f32 %v1114, %v1439
    %v1504 = vadd.f32 %v1115, %v1440
    %v1505 = vadd.f32 %v1116, %v1441
    %v1506 = vadd.f32 %v1117, %v1442
    %v1507 = vadd.f32 %v1118, %v1443
    %v1508 = vadd.f32 %v1119, %v1444
    %v1509 = vadd.f32 %v1120, %v1445
    %v1510 = vadd.f32 %v1121, %v1446
    %v1511 = vadd.f32 %v1122, %v1447
    %v1512 = vadd.f32 %v1123, %v1448
    %v1513 = vadd.f32 %v1124, %v1449
    %v1514 = vadd.f32 %v1125, %v1450
    %v1515 = vadd.f32 %v1126, %v1451
    %v1516 = vadd.f32 %v1127, %v1452
    %v1517 = vadd.f32 %v1128, %v1453
    %v1518 = vadd.f32 %v1129, %v1454
    %v1519 = vadd.f32 %v1130, %v1455
    %v1520 = vadd.f32 %v1131, %v1456
    %v1521 = vadd.f32 %v1132, %v1457
    %v1522 = vld [vmem:[%s3 + $0x3] sm:$0x1]
    %1523 = vset.pattern.permute.xlu0 3
    %1524 = vperm.xlu0 %1523, %v227
    %v1525 = vpop.permute.xlu0 %1524
    %1527 = vset.pattern.permute.xlu0 3
    %1528 = vperm.xlu0 %1527, %v228
    %v1529 = vpop.permute.xlu0 %1528
    %1531 = vset.pattern.permute.xlu0 3
    %1532 = vperm.xlu0 %1531, %v229
    %v1533 = vpop.permute.xlu0 %1532
    %1535 = vset.pattern.permute.xlu0 3
    %1536 = vperm.xlu0 %1535, %v230
    %v1537 = vpop.permute.xlu0 %1536
    %1539 = vset.pattern.permute.xlu0 3
    %1540 = vperm.xlu0 %1539, %v231
    %v1541 = vpop.permute.xlu0 %1540
    %1543 = vset.pattern.permute.xlu0 3
    %1544 = vperm.xlu0 %1543, %v232
    %v1545 = vpop.permute.xlu0 %1544
    %1547 = vset.pattern.permute.xlu0 3
    %1548 = vperm.xlu0 %1547, %v233
    %v1549 = vpop.permute.xlu0 %1548
    %1551 = vset.pattern.permute.xlu0 3
    %1552 = vperm.xlu0 %1551, %v234
    %v1553 = vpop.permute.xlu0 %1552
    %1555 = vset.pattern.permute.xlu0 3
    %1556 = vperm.xlu0 %1555, %v235
    %v1557 = vpop.permute.xlu0 %1556
    %1559 = vset.pattern.permute.xlu0 3
    %1560 = vperm.xlu0 %1559, %v236
    %v1561 = vpop.permute.xlu0 %1560
    %1563 = vset.pattern.permute.xlu0 3
    %1564 = vperm.xlu0 %1563, %v237
    %v1565 = vpop.permute.xlu0 %1564
    %1567 = vset.pattern.permute.xlu0 3
    %1568 = vperm.xlu0 %1567, %v238
    %v1569 = vpop.permute.xlu0 %1568
    %1571 = vset.pattern.permute.xlu0 3
    %1572 = vperm.xlu0 %1571, %v239
    %v1573 = vpop.permute.xlu0 %1572
    %1575 = vset.pattern.permute.xlu0 3
    %1576 = vperm.xlu0 %1575, %v240
    %v1577 = vpop.permute.xlu0 %1576
    %1579 = vset.pattern.permute.xlu0 3
    %1580 = vperm.xlu0 %1579, %v241
    %v1581 = vpop.permute.xlu0 %1580
    %1583 = vset.pattern.permute.xlu0 3
    %1584 = vperm.xlu0 %1583, %v242
    %v1585 = vpop.permute.xlu0 %1584
    %1587 = vset.pattern.permute.xlu0 3
    %1588 = vperm.xlu0 %1587, %v243
    %v1589 = vpop.permute.xlu0 %1588
    %1591 = vset.pattern.permute.xlu0 3
    %1592 = vperm.xlu0 %1591, %v244
    %v1593 = vpop.permute.xlu0 %1592
    %1595 = vset.pattern.permute.xlu0 3
    %1596 = vperm.xlu0 %1595, %v245
    %v1597 = vpop.permute.xlu0 %1596
    %1599 = vset.pattern.permute.xlu0 3
    %1600 = vperm.xlu0 %1599, %v246
    %v1601 = vpop.permute.xlu0 %1600
    %1603 = vset.pattern.permute.xlu0 3
    %1604 = vperm.xlu0 %1603, %v247
    %v1605 = vpop.permute.xlu0 %1604
    %1607 = vset.pattern.permute.xlu0 3
    %1608 = vperm.xlu0 %1607, %v248
    %v1609 = vpop.permute.xlu0 %1608
    %1611 = vset.pattern.permute.xlu0 3
    %1612 = vperm.xlu0 %1611, %v249
    %v1613 = vpop.permute.xlu0 %1612
    %1615 = vset.pattern.permute.xlu0 3
    %1616 = vperm.xlu0 %1615, %v250
    %v1617 = vpop.permute.xlu0 %1616
    %1619 = vset.pattern.permute.xlu0 3
    %1620 = vperm.xlu0 %1619, %v251
    %v1621 = vpop.permute.xlu0 %1620
    %1623 = vset.pattern.permute.xlu0 3
    %1624 = vperm.xlu0 %1623, %v252
    %v1625 = vpop.permute.xlu0 %1624
    %1627 = vset.pattern.permute.xlu0 3
    %1628 = vperm.xlu0 %1627, %v253
    %v1629 = vpop.permute.xlu0 %1628
    %1631 = vset.pattern.permute.xlu0 3
    %1632 = vperm.xlu0 %1631, %v254
    %v1633 = vpop.permute.xlu0 %1632
    %1635 = vset.pattern.permute.xlu0 3
    %1636 = vperm.xlu0 %1635, %v255
    %v1637 = vpop.permute.xlu0 %1636
    %1639 = vset.pattern.permute.xlu0 3
    %1640 = vperm.xlu0 %1639, %v256
    %v1641 = vpop.permute.xlu0 %1640
    %1643 = vset.pattern.permute.xlu0 3
    %1644 = vperm.xlu0 %1643, %v257
    %v1645 = vpop.permute.xlu0 %1644
    %1647 = vset.pattern.permute.xlu0 3
    %1648 = vperm.xlu0 %1647, %v258
    %v1649 = vpop.permute.xlu0 %1648
    %1651 = vset.pattern.permute.xlu0 3
    %1652 = vperm.xlu0 %1651, %v259
    %v1653 = vpop.permute.xlu0 %1652
    %1655 = vset.pattern.permute.xlu0 3
    %1656 = vperm.xlu0 %1655, %v260
    %v1657 = vpop.permute.xlu0 %1656
    %1659 = vset.pattern.permute.xlu0 3
    %1660 = vperm.xlu0 %1659, %v261
    %v1661 = vpop.permute.xlu0 %1660
    %1663 = vset.pattern.permute.xlu0 3
    %1664 = vperm.xlu0 %1663, %v262
    %v1665 = vpop.permute.xlu0 %1664
    %1667 = vset.pattern.permute.xlu0 3
    %1668 = vperm.xlu0 %1667, %v263
    %v1669 = vpop.permute.xlu0 %1668
    %1671 = vset.pattern.permute.xlu0 3
    %1672 = vperm.xlu0 %1671, %v264
    %v1673 = vpop.permute.xlu0 %1672
    %1675 = vset.pattern.permute.xlu0 3
    %1676 = vperm.xlu0 %1675, %v265
    %v1677 = vpop.permute.xlu0 %1676
    %1679 = vset.pattern.permute.xlu0 3
    %1680 = vperm.xlu0 %1679, %v266
    %v1681 = vpop.permute.xlu0 %1680
    %1683 = vset.pattern.permute.xlu0 3
    %1684 = vperm.xlu0 %1683, %v267
    %v1685 = vpop.permute.xlu0 %1684
    %1687 = vset.pattern.permute.xlu0 3
    %1688 = vperm.xlu0 %1687, %v268
    %v1689 = vpop.permute.xlu0 %1688
    %1691 = vset.pattern.permute.xlu0 3
    %1692 = vperm.xlu0 %1691, %v269
    %v1693 = vpop.permute.xlu0 %1692
    %1695 = vset.pattern.permute.xlu0 3
    %1696 = vperm.xlu0 %1695, %v270
    %v1697 = vpop.permute.xlu0 %1696
    %1699 = vset.pattern.permute.xlu0 3
    %1700 = vperm.xlu0 %1699, %v271
    %v1701 = vpop.permute.xlu0 %1700
    %1703 = vset.pattern.permute.xlu0 3
    %1704 = vperm.xlu0 %1703, %v272
    %v1705 = vpop.permute.xlu0 %1704
    %1707 = vset.pattern.permute.xlu0 3
    %1708 = vperm.xlu0 %1707, %v273
    %v1709 = vpop.permute.xlu0 %1708
    %1711 = vset.pattern.permute.xlu0 3
    %1712 = vperm.xlu0 %1711, %v274
    %v1713 = vpop.permute.xlu0 %1712
    %1715 = vset.pattern.permute.xlu0 3
    %1716 = vperm.xlu0 %1715, %v275
    %v1717 = vpop.permute.xlu0 %1716
    %1719 = vset.pattern.permute.xlu0 3
    %1720 = vperm.xlu0 %1719, %v276
    %v1721 = vpop.permute.xlu0 %1720
    %1723 = vset.pattern.permute.xlu0 3
    %1724 = vperm.xlu0 %1723, %v277
    %v1725 = vpop.permute.xlu0 %1724
    %1727 = vset.pattern.permute.xlu0 3
    %1728 = vperm.xlu0 %1727, %v278
    %v1729 = vpop.permute.xlu0 %1728
    %1731 = vset.pattern.permute.xlu0 3
    %1732 = vperm.xlu0 %1731, %v279
    %v1733 = vpop.permute.xlu0 %1732
    %1735 = vset.pattern.permute.xlu0 3
    %1736 = vperm.xlu0 %1735, %v280
    %v1737 = vpop.permute.xlu0 %1736
    %1739 = vset.pattern.permute.xlu0 3
    %1740 = vperm.xlu0 %1739, %v281
    %v1741 = vpop.permute.xlu0 %1740
    %1743 = vset.pattern.permute.xlu0 3
    %1744 = vperm.xlu0 %1743, %v282
    %v1745 = vpop.permute.xlu0 %1744
    %1747 = vset.pattern.permute.xlu0 3
    %1748 = vperm.xlu0 %1747, %v283
    %v1749 = vpop.permute.xlu0 %1748
    %1751 = vset.pattern.permute.xlu0 3
    %1752 = vperm.xlu0 %1751, %v284
    %v1753 = vpop.permute.xlu0 %1752
    %1755 = vset.pattern.permute.xlu0 3
    %1756 = vperm.xlu0 %1755, %v285
    %v1757 = vpop.permute.xlu0 %1756
    %1759 = vset.pattern.permute.xlu0 3
    %1760 = vperm.xlu0 %1759, %v286
    %v1761 = vpop.permute.xlu0 %1760
    %1763 = vset.pattern.permute.xlu0 3
    %1764 = vperm.xlu0 %1763, %v287
    %v1765 = vpop.permute.xlu0 %1764
    %1767 = vset.pattern.permute.xlu0 3
    %1768 = vperm.xlu0 %1767, %v288
    %v1769 = vpop.permute.xlu0 %1768
    %1771 = vset.pattern.permute.xlu0 3
    %1772 = vperm.xlu0 %1771, %v289
    %v1773 = vpop.permute.xlu0 %1772
    %1775 = vset.pattern.permute.xlu0 3
    %1776 = vperm.xlu0 %1775, %v290
    %v1777 = vpop.permute.xlu0 %1776
    %v1779 = vlaneseq
    %v1780 = vshrl.u32 %v1779, 7
    %v1781 = vsub.s32 0, %v1780
    %v1782 = vrot.slane %v1522, %v1781
    %v1783 = vmul.f32 %v1525, %v1782
    %v1784 = vmul.f32 %v1529, %v1782
    %v1785 = vmul.f32 %v1533, %v1782
    %v1786 = vmul.f32 %v1537, %v1782
    %v1787 = vmul.f32 %v1541, %v1782
    %v1788 = vmul.f32 %v1545, %v1782
    %v1789 = vmul.f32 %v1549, %v1782
    %v1790 = vmul.f32 %v1553, %v1782
    %v1791 = vmul.f32 %v1557, %v1782
    %v1792 = vmul.f32 %v1561, %v1782
    %v1793 = vmul.f32 %v1565, %v1782
    %v1794 = vmul.f32 %v1569, %v1782
    %v1795 = vmul.f32 %v1573, %v1782
    %v1796 = vmul.f32 %v1577, %v1782
    %v1797 = vmul.f32 %v1581, %v1782
    %v1798 = vmul.f32 %v1585, %v1782
    %v1799 = vmul.f32 %v1589, %v1782
    %v1800 = vmul.f32 %v1593, %v1782
    %v1801 = vmul.f32 %v1597, %v1782
    %v1802 = vmul.f32 %v1601, %v1782
    %v1803 = vmul.f32 %v1605, %v1782
    %v1804 = vmul.f32 %v1609, %v1782
    %v1805 = vmul.f32 %v1613, %v1782
    %v1806 = vmul.f32 %v1617, %v1782
    %v1807 = vmul.f32 %v1621, %v1782
    %v1808 = vmul.f32 %v1625, %v1782
    %v1809 = vmul.f32 %v1629, %v1782
    %v1810 = vmul.f32 %v1633, %v1782
    %v1811 = vmul.f32 %v1637, %v1782
    %v1812 = vmul.f32 %v1641, %v1782
    %v1813 = vmul.f32 %v1645, %v1782
    %v1814 = vmul.f32 %v1649, %v1782
    %v1815 = vmul.f32 %v1653, %v1782
    %v1816 = vmul.f32 %v1657, %v1782
    %v1817 = vmul.f32 %v1661, %v1782
    %v1818 = vmul.f32 %v1665, %v1782
    %v1819 = vmul.f32 %v1669, %v1782
    %v1820 = vmul.f32 %v1673, %v1782
    %v1821 = vmul.f32 %v1677, %v1782
    %v1822 = vmul.f32 %v1681, %v1782
    %v1823 = vmul.f32 %v1685, %v1782
    %v1824 = vmul.f32 %v1689, %v1782
    %v1825 = vmul.f32 %v1693, %v1782
    %v1826 = vmul.f32 %v1697, %v1782
    %v1827 = vmul.f32 %v1701, %v1782
    %v1828 = vmul.f32 %v1705, %v1782
    %v1829 = vmul.f32 %v1709, %v1782
    %v1830 = vmul.f32 %v1713, %v1782
    %v1831 = vmul.f32 %v1717, %v1782
    %v1832 = vmul.f32 %v1721, %v1782
    %v1833 = vmul.f32 %v1725, %v1782
    %v1834 = vmul.f32 %v1729, %v1782
    %v1835 = vmul.f32 %v1733, %v1782
    %v1836 = vmul.f32 %v1737, %v1782
    %v1837 = vmul.f32 %v1741, %v1782
    %v1838 = vmul.f32 %v1745, %v1782
    %v1839 = vmul.f32 %v1749, %v1782
    %v1840 = vmul.f32 %v1753, %v1782
    %v1841 = vmul.f32 %v1757, %v1782
    %v1842 = vmul.f32 %v1761, %v1782
    %v1843 = vmul.f32 %v1765, %v1782
    %v1844 = vmul.f32 %v1769, %v1782
    %v1845 = vmul.f32 %v1773, %v1782
    %v1846 = vmul.f32 %v1777, %v1782
    %v1847 = vadd.f32 %v1458, %v1783
    %v1848 = vadd.f32 %v1459, %v1784
    %v1849 = vadd.f32 %v1460, %v1785
    %v1850 = vadd.f32 %v1461, %v1786
    %v1851 = vadd.f32 %v1462, %v1787
    %v1852 = vadd.f32 %v1463, %v1788
    %v1853 = vadd.f32 %v1464, %v1789
    %v1854 = vadd.f32 %v1465, %v1790
    %v1855 = vadd.f32 %v1466, %v1791
    %v1856 = vadd.f32 %v1467, %v1792
    %v1857 = vadd.f32 %v1468, %v1793
    %v1858 = vadd.f32 %v1469, %v1794
    %v1859 = vadd.f32 %v1470, %v1795
    %v1860 = vadd.f32 %v1471, %v1796
    %v1861 = vadd.f32 %v1472, %v1797
    %v1862 = vadd.f32 %v1473, %v1798
    %v1863 = vadd.f32 %v1474, %v1799
    %v1864 = vadd.f32 %v1475, %v1800
    %v1865 = vadd.f32 %v1476, %v1801
    %v1866 = vadd.f32 %v1477, %v1802
    %v1867 = vadd.f32 %v1478, %v1803
    %v1868 = vadd.f32 %v1479, %v1804
    %v1869 = vadd.f32 %v1480, %v1805
    %v1870 = vadd.f32 %v1481, %v1806
    %v1871 = vadd.f32 %v1482, %v1807
    %v1872 = vadd.f32 %v1483, %v1808
    %v1873 = vadd.f32 %v1484, %v1809
    %v1874 = vadd.f32 %v1485, %v1810
    %v1875 = vadd.f32 %v1486, %v1811
    %v1876 = vadd.f32 %v1487, %v1812
    %v1877 = vadd.f32 %v1488, %v1813
    %v1878 = vadd.f32 %v1489, %v1814
    %v1879 = vadd.f32 %v1490, %v1815
    %v1880 = vadd.f32 %v1491, %v1816
    %v1881 = vadd.f32 %v1492, %v1817
    %v1882 = vadd.f32 %v1493, %v1818
    %v1883 = vadd.f32 %v1494, %v1819
    %v1884 = vadd.f32 %v1495, %v1820
    %v1885 = vadd.f32 %v1496, %v1821
    %v1886 = vadd.f32 %v1497, %v1822
    %v1887 = vadd.f32 %v1498, %v1823
    %v1888 = vadd.f32 %v1499, %v1824
    %v1889 = vadd.f32 %v1500, %v1825
    %v1890 = vadd.f32 %v1501, %v1826
    %v1891 = vadd.f32 %v1502, %v1827
    %v1892 = vadd.f32 %v1503, %v1828
    %v1893 = vadd.f32 %v1504, %v1829
    %v1894 = vadd.f32 %v1505, %v1830
    %v1895 = vadd.f32 %v1506, %v1831
    %v1896 = vadd.f32 %v1507, %v1832
    %v1897 = vadd.f32 %v1508, %v1833
    %v1898 = vadd.f32 %v1509, %v1834
    %v1899 = vadd.f32 %v1510, %v1835
    %v1900 = vadd.f32 %v1511, %v1836
    %v1901 = vadd.f32 %v1512, %v1837
    %v1902 = vadd.f32 %v1513, %v1838
    %v1903 = vadd.f32 %v1514, %v1839
    %v1904 = vadd.f32 %v1515, %v1840
    %v1905 = vadd.f32 %v1516, %v1841
    %v1906 = vadd.f32 %v1517, %v1842
    %v1907 = vadd.f32 %v1518, %v1843
    %v1908 = vadd.f32 %v1519, %v1844
    %v1909 = vadd.f32 %v1520, %v1845
    %v1910 = vadd.f32 %v1521, %v1846
    %v1911 = vld [vmem:[%s4] sm:$0x1]
    %v1913 = vlaneseq
    %v1914 = vshrl.u32 %v1913, 7
    %v1915 = vsub.s32 0, %v1914
    %v1916 = vrot.slane %v1911, %v1915
    %v1918 = vadd.f32 %v1847, %v1916
    %v1919 = vadd.f32 %v1848, %v1916
    %v1920 = vadd.f32 %v1849, %v1916
    %v1921 = vadd.f32 %v1850, %v1916
    %v1922 = vadd.f32 %v1851, %v1916
    %v1923 = vadd.f32 %v1852, %v1916
    %v1924 = vadd.f32 %v1853, %v1916
    %v1925 = vadd.f32 %v1854, %v1916
    %v1926 = vadd.f32 %v1855, %v1916
    %v1927 = vadd.f32 %v1856, %v1916
    %v1928 = vadd.f32 %v1857, %v1916
    %v1929 = vadd.f32 %v1858, %v1916
    %v1930 = vadd.f32 %v1859, %v1916
    %v1931 = vadd.f32 %v1860, %v1916
    %v1932 = vadd.f32 %v1861, %v1916
    %v1933 = vadd.f32 %v1862, %v1916
    %v1934 = vadd.f32 %v1863, %v1916
    %v1935 = vadd.f32 %v1864, %v1916
    %v1936 = vadd.f32 %v1865, %v1916
    %v1937 = vadd.f32 %v1866, %v1916
    %v1938 = vadd.f32 %v1867, %v1916
    %v1939 = vadd.f32 %v1868, %v1916
    %v1940 = vadd.f32 %v1869, %v1916
    %v1941 = vadd.f32 %v1870, %v1916
    %v1942 = vadd.f32 %v1871, %v1916
    %v1943 = vadd.f32 %v1872, %v1916
    %v1944 = vadd.f32 %v1873, %v1916
    %v1945 = vadd.f32 %v1874, %v1916
    %v1946 = vadd.f32 %v1875, %v1916
    %v1947 = vadd.f32 %v1876, %v1916
    %v1948 = vadd.f32 %v1877, %v1916
    %v1949 = vadd.f32 %v1878, %v1916
    %v1950 = vadd.f32 %v1879, %v1916
    %v1951 = vadd.f32 %v1880, %v1916
    %v1952 = vadd.f32 %v1881, %v1916
    %v1953 = vadd.f32 %v1882, %v1916
    %v1954 = vadd.f32 %v1883, %v1916
    %v1955 = vadd.f32 %v1884, %v1916
    %v1956 = vadd.f32 %v1885, %v1916
    %v1957 = vadd.f32 %v1886, %v1916
    %v1958 = vadd.f32 %v1887, %v1916
    %v1959 = vadd.f32 %v1888, %v1916
    %v1960 = vadd.f32 %v1889, %v1916
    %v1961 = vadd.f32 %v1890, %v1916
    %v1962 = vadd.f32 %v1891, %v1916
    %v1963 = vadd.f32 %v1892, %v1916
    %v1964 = vadd.f32 %v1893, %v1916
    %v1965 = vadd.f32 %v1894, %v1916
    %v1966 = vadd.f32 %v1895, %v1916
    %v1967 = vadd.f32 %v1896, %v1916
    %v1968 = vadd.f32 %v1897, %v1916
    %v1969 = vadd.f32 %v1898, %v1916
    %v1970 = vadd.f32 %v1899, %v1916
    %v1971 = vadd.f32 %v1900, %v1916
    %v1972 = vadd.f32 %v1901, %v1916
    %v1973 = vadd.f32 %v1902, %v1916
    %v1974 = vadd.f32 %v1903, %v1916
    %v1975 = vadd.f32 %v1904, %v1916
    %v1976 = vadd.f32 %v1905, %v1916
    %v1977 = vadd.f32 %v1906, %v1916
    %v1978 = vadd.f32 %v1907, %v1916
    %v1979 = vadd.f32 %v1908, %v1916
    %v1980 = vadd.f32 %v1909, %v1916
    %v1981 = vadd.f32 %v1910, %v1916
    %v1982 = vmax.f32 %v1918, 0.0
    %v1983 = vmax.f32 %v1919, 0.0
    %v1984 = vmax.f32 %v1920, 0.0
    %v1985 = vmax.f32 %v1921, 0.0
    %v1986 = vmax.f32 %v1922, 0.0
    %v1987 = vmax.f32 %v1923, 0.0
    %v1988 = vmax.f32 %v1924, 0.0
    %v1989 = vmax.f32 %v1925, 0.0
    %v1990 = vmax.f32 %v1926, 0.0
    %v1991 = vmax.f32 %v1927, 0.0
    %v1992 = vmax.f32 %v1928, 0.0
    %v1993 = vmax.f32 %v1929, 0.0
    %v1994 = vmax.f32 %v1930, 0.0
    %v1995 = vmax.f32 %v1931, 0.0
    %v1996 = vmax.f32 %v1932, 0.0
    %v1997 = vmax.f32 %v1933, 0.0
    %v1998 = vmax.f32 %v1934, 0.0
    %v1999 = vmax.f32 %v1935, 0.0
    %v2000 = vmax.f32 %v1936, 0.0
    %v2001 = vmax.f32 %v1937, 0.0
    %v2002 = vmax.f32 %v1938, 0.0
    %v2003 = vmax.f32 %v1939, 0.0
    %v2004 = vmax.f32 %v1940, 0.0
    %v2005 = vmax.f32 %v1941, 0.0
    %v2006 = vmax.f32 %v1942, 0.0
    %v2007 = vmax.f32 %v1943, 0.0
    %v2008 = vmax.f32 %v1944, 0.0
    %v2009 = vmax.f32 %v1945, 0.0
    %v2010 = vmax.f32 %v1946, 0.0
    %v2011 = vmax.f32 %v1947, 0.0
    %v2012 = vmax.f32 %v1948, 0.0
    %v2013 = vmax.f32 %v1949, 0.0
    %v2014 = vmax.f32 %v1950, 0.0
    %v2015 = vmax.f32 %v1951, 0.0
    %v2016 = vmax.f32 %v1952, 0.0
    %v2017 = vmax.f32 %v1953, 0.0
    %v2018 = vmax.f32 %v1954, 0.0
    %v2019 = vmax.f32 %v1955, 0.0
    %v2020 = vmax.f32 %v1956, 0.0
    %v2021 = vmax.f32 %v1957, 0.0
    %v2022 = vmax.f32 %v1958, 0.0
    %v2023 = vmax.f32 %v1959, 0.0
    %v2024 = vmax.f32 %v1960, 0.0
    %v2025 = vmax.f32 %v1961, 0.0
    %v2026 = vmax.f32 %v1962, 0.0
    %v2027 = vmax.f32 %v1963, 0.0
    %v2028 = vmax.f32 %v1964, 0.0
    %v2029 = vmax.f32 %v1965, 0.0
    %v2030 = vmax.f32 %v1966, 0.0
    %v2031 = vmax.f32 %v1967, 0.0
    %v2032 = vmax.f32 %v1968, 0.0
    %v2033 = vmax.f32 %v1969, 0.0
    %v2034 = vmax.f32 %v1970, 0.0
    %v2035 = vmax.f32 %v1971, 0.0
    %v2036 = vmax.f32 %v1972, 0.0
    %v2037 = vmax.f32 %v1973, 0.0
    %v2038 = vmax.f32 %v1974, 0.0
    %v2039 = vmax.f32 %v1975, 0.0
    %v2040 = vmax.f32 %v1976, 0.0
    %v2041 = vmax.f32 %v1977, 0.0
    %v2042 = vmax.f32 %v1978, 0.0
    %v2043 = vmax.f32 %v1979, 0.0
    %v2044 = vmax.f32 %v1980, 0.0
    %v2045 = vmax.f32 %v1981, 0.0
    %v2046 = vpack.c.bf16 %v1983, %v1982
    %v2047 = vpack.c.bf16 %v1985, %v1984
    %v2048 = vpack.c.bf16 %v1987, %v1986
    %v2049 = vpack.c.bf16 %v1989, %v1988
    %v2050 = vpack.c.bf16 %v1991, %v1990
    %v2051 = vpack.c.bf16 %v1993, %v1992
    %v2052 = vpack.c.bf16 %v1995, %v1994
    %v2053 = vpack.c.bf16 %v1997, %v1996
    %v2054 = vpack.c.bf16 %v1999, %v1998
    %v2055 = vpack.c.bf16 %v2001, %v2000
    %v2056 = vpack.c.bf16 %v2003, %v2002
    %v2057 = vpack.c.bf16 %v2005, %v2004
    %v2058 = vpack.c.bf16 %v2007, %v2006
    %v2059 = vpack.c.bf16 %v2009, %v2008
    %v2060 = vpack.c.bf16 %v2011, %v2010
    %v2061 = vpack.c.bf16 %v2013, %v2012
    %v2062 = vpack.c.bf16 %v2015, %v2014
    %v2063 = vpack.c.bf16 %v2017, %v2016
    %v2064 = vpack.c.bf16 %v2019, %v2018
    %v2065 = vpack.c.bf16 %v2021, %v2020
    %v2066 = vpack.c.bf16 %v2023, %v2022
    %v2067 = vpack.c.bf16 %v2025, %v2024
    %v2068 = vpack.c.bf16 %v2027, %v2026
    %v2069 = vpack.c.bf16 %v2029, %v2028
    %v2070 = vpack.c.bf16 %v2031, %v2030
    %v2071 = vpack.c.bf16 %v2033, %v2032
    %v2072 = vpack.c.bf16 %v2035, %v2034
    %v2073 = vpack.c.bf16 %v2037, %v2036
    %v2074 = vpack.c.bf16 %v2039, %v2038
    %v2075 = vpack.c.bf16 %v2041, %v2040
    %v2076 = vpack.c.bf16 %v2043, %v2042
    %v2077 = vpack.c.bf16 %v2045, %v2044
    %v2110 = vunpack.c.l.b16 %v2046
    %v2111 = vunpack.c.h.b16 %v2046
    %v2112 = vunpack.c.l.b16 %v2047
    %v2113 = vunpack.c.h.b16 %v2047
    %v2114 = vunpack.c.l.b16 %v2048
    %v2115 = vunpack.c.h.b16 %v2048
    %v2116 = vunpack.c.l.b16 %v2049
    %v2117 = vunpack.c.h.b16 %v2049
    %v2118 = vunpack.c.l.b16 %v2050
    %v2119 = vunpack.c.h.b16 %v2050
    %v2120 = vunpack.c.l.b16 %v2051
    %v2121 = vunpack.c.h.b16 %v2051
    %v2122 = vunpack.c.l.b16 %v2052
    %v2123 = vunpack.c.h.b16 %v2052
    %v2124 = vunpack.c.l.b16 %v2053
    %v2125 = vunpack.c.h.b16 %v2053
    %v2126 = vunpack.c.l.b16 %v2054
    %v2127 = vunpack.c.h.b16 %v2054
    %v2128 = vunpack.c.l.b16 %v2055
    %v2129 = vunpack.c.h.b16 %v2055
    %v2130 = vunpack.c.l.b16 %v2056
    %v2131 = vunpack.c.h.b16 %v2056
    %v2132 = vunpack.c.l.b16 %v2057
    %v2133 = vunpack.c.h.b16 %v2057
    %v2134 = vunpack.c.l.b16 %v2058
    %v2135 = vunpack.c.h.b16 %v2058
    %v2136 = vunpack.c.l.b16 %v2059
    %v2137 = vunpack.c.h.b16 %v2059
    %v2138 = vunpack.c.l.b16 %v2060
    %v2139 = vunpack.c.h.b16 %v2060
    %v2140 = vunpack.c.l.b16 %v2061
    %v2141 = vunpack.c.h.b16 %v2061
    %v2142 = vunpack.c.l.b16 %v2062
    %v2143 = vunpack.c.h.b16 %v2062
    %v2144 = vunpack.c.l.b16 %v2063
    %v2145 = vunpack.c.h.b16 %v2063
    %v2146 = vunpack.c.l.b16 %v2064
    %v2147 = vunpack.c.h.b16 %v2064
    %v2148 = vunpack.c.l.b16 %v2065
    %v2149 = vunpack.c.h.b16 %v2065
    %v2150 = vunpack.c.l.b16 %v2066
    %v2151 = vunpack.c.h.b16 %v2066
    %v2152 = vunpack.c.l.b16 %v2067
    %v2153 = vunpack.c.h.b16 %v2067
    %v2154 = vunpack.c.l.b16 %v2068
    %v2155 = vunpack.c.h.b16 %v2068
    %v2156 = vunpack.c.l.b16 %v2069
    %v2157 = vunpack.c.h.b16 %v2069
    %v2158 = vunpack.c.l.b16 %v2070
    %v2159 = vunpack.c.h.b16 %v2070
    %v2160 = vunpack.c.l.b16 %v2071
    %v2161 = vunpack.c.h.b16 %v2071
    %v2162 = vunpack.c.l.b16 %v2072
    %v2163 = vunpack.c.h.b16 %v2072
    %v2164 = vunpack.c.l.b16 %v2073
    %v2165 = vunpack.c.h.b16 %v2073
    %v2166 = vunpack.c.l.b16 %v2074
    %v2167 = vunpack.c.h.b16 %v2074
    %v2168 = vunpack.c.l.b16 %v2075
    %v2169 = vunpack.c.h.b16 %v2075
    %v2170 = vunpack.c.l.b16 %v2076
    %v2171 = vunpack.c.h.b16 %v2076
    %v2172 = vunpack.c.l.b16 %v2077
    %v2173 = vunpack.c.h.b16 %v2077
    %v2174 = vpack.c.b16 %v2110, %v2110
    %v2175 = vpack.c.b16 %v2111, %v2111
    %v2176 = vpack.c.b16 %v2112, %v2112
    %v2177 = vpack.c.b16 %v2113, %v2113
    %v2178 = vpack.c.b16 %v2114, %v2114
    %v2179 = vpack.c.b16 %v2115, %v2115
    %v2180 = vpack.c.b16 %v2116, %v2116
    %v2181 = vpack.c.b16 %v2117, %v2117
    %v2182 = vpack.c.b16 %v2118, %v2118
    %v2183 = vpack.c.b16 %v2119, %v2119
    %v2184 = vpack.c.b16 %v2120, %v2120
    %v2185 = vpack.c.b16 %v2121, %v2121
    %v2186 = vpack.c.b16 %v2122, %v2122
    %v2187 = vpack.c.b16 %v2123, %v2123
    %v2188 = vpack.c.b16 %v2124, %v2124
    %v2189 = vpack.c.b16 %v2125, %v2125
    %v2190 = vpack.c.b16 %v2126, %v2126
    %v2191 = vpack.c.b16 %v2127, %v2127
    %v2192 = vpack.c.b16 %v2128, %v2128
    %v2193 = vpack.c.b16 %v2129, %v2129
    %v2194 = vpack.c.b16 %v2130, %v2130
    %v2195 = vpack.c.b16 %v2131, %v2131
    %v2196 = vpack.c.b16 %v2132, %v2132
    %v2197 = vpack.c.b16 %v2133, %v2133
    %v2198 = vpack.c.b16 %v2134, %v2134
    %v2199 = vpack.c.b16 %v2135, %v2135
    %v2200 = vpack.c.b16 %v2136, %v2136
    %v2201 = vpack.c.b16 %v2137, %v2137
    %v2202 = vpack.c.b16 %v2138, %v2138
    %v2203 = vpack.c.b16 %v2139, %v2139
    %v2204 = vpack.c.b16 %v2140, %v2140
    %v2205 = vpack.c.b16 %v2141, %v2141
    %v2206 = vpack.c.b16 %v2142, %v2142
    %v2207 = vpack.c.b16 %v2143, %v2143
    %v2208 = vpack.c.b16 %v2144, %v2144
    %v2209 = vpack.c.b16 %v2145, %v2145
    %v2210 = vpack.c.b16 %v2146, %v2146
    %v2211 = vpack.c.b16 %v2147, %v2147
    %v2212 = vpack.c.b16 %v2148, %v2148
    %v2213 = vpack.c.b16 %v2149, %v2149
    %v2214 = vpack.c.b16 %v2150, %v2150
    %v2215 = vpack.c.b16 %v2151, %v2151
    %v2216 = vpack.c.b16 %v2152, %v2152
    %v2217 = vpack.c.b16 %v2153, %v2153
    %v2218 = vpack.c.b16 %v2154, %v2154
    %v2219 = vpack.c.b16 %v2155, %v2155
    %v2220 = vpack.c.b16 %v2156, %v2156
    %v2221 = vpack.c.b16 %v2157, %v2157
    %v2222 = vpack.c.b16 %v2158, %v2158
    %v2223 = vpack.c.b16 %v2159, %v2159
    %v2224 = vpack.c.b16 %v2160, %v2160
    %v2225 = vpack.c.b16 %v2161, %v2161
    %v2226 = vpack.c.b16 %v2162, %v2162
    %v2227 = vpack.c.b16 %v2163, %v2163
    %v2228 = vpack.c.b16 %v2164, %v2164
    %v2229 = vpack.c.b16 %v2165, %v2165
    %v2230 = vpack.c.b16 %v2166, %v2166
    %v2231 = vpack.c.b16 %v2167, %v2167
    %v2232 = vpack.c.b16 %v2168, %v2168
    %v2233 = vpack.c.b16 %v2169, %v2169
    %v2234 = vpack.c.b16 %v2170, %v2170
    %v2235 = vpack.c.b16 %v2171, %v2171
    %v2236 = vpack.c.b16 %v2172, %v2172
    %v2237 = vpack.c.b16 %v2173, %v2173
    %2302 = vst [vmem:[#allocation2] sm:$0xf] %v2174
    %2303 = vst [vmem:[#allocation2 + $0x4] sm:$0xf] %v2175
    %2304 = vst [vmem:[#allocation2 + $0x8] sm:$0xf] %v2176
    %2305 = vst [vmem:[#allocation2 + $0xc] sm:$0xf] %v2177
    %2306 = vst [vmem:[#allocation2 + $0x10] sm:$0xf] %v2178
    %2307 = vst [vmem:[#allocation2 + $0x14] sm:$0xf] %v2179
    %2308 = vst [vmem:[#allocation2 + $0x18] sm:$0xf] %v2180
    %2309 = vst [vmem:[#allocation2 + $0x1c] sm:$0xf] %v2181
    %2310 = vst [vmem:[#allocation2 + $0x20] sm:$0xf] %v2182
    %2311 = vst [vmem:[#allocation2 + $0x24] sm:$0xf] %v2183
    %2312 = vst [vmem:[#allocation2 + $0x28] sm:$0xf] %v2184
    %2313 = vst [vmem:[#allocation2 + $0x2c] sm:$0xf] %v2185
    %2314 = vst [vmem:[#allocation2 + $0x30] sm:$0xf] %v2186
    %2315 = vst [vmem:[#allocation2 + $0x34] sm:$0xf] %v2187
    %2316 = vst [vmem:[#allocation2 + $0x38] sm:$0xf] %v2188
    %2317 = vst [vmem:[#allocation2 + $0x3c] sm:$0xf] %v2189
    %2318 = vst [vmem:[#allocation2 + $0x40] sm:$0xf] %v2190
    %2319 = vst [vmem:[#allocation2 + $0x44] sm:$0xf] %v2191
    %2320 = vst [vmem:[#allocation2 + $0x48] sm:$0xf] %v2192
    %2321 = vst [vmem:[#allocation2 + $0x4c] sm:$0xf] %v2193
    %2322 = vst [vmem:[#allocation2 + $0x50] sm:$0xf] %v2194
    %2323 = vst [vmem:[#allocation2 + $0x54] sm:$0xf] %v2195
    %2324 = vst [vmem:[#allocation2 + $0x58] sm:$0xf] %v2196
    %2325 = vst [vmem:[#allocation2 + $0x5c] sm:$0xf] %v2197
    %2326 = vst [vmem:[#allocation2 + $0x60] sm:$0xf] %v2198
    %2327 = vst [vmem:[#allocation2 + $0x64] sm:$0xf] %v2199
    %2328 = vst [vmem:[#allocation2 + $0x68] sm:$0xf] %v2200
    %2329 = vst [vmem:[#allocation2 + $0x6c] sm:$0xf] %v2201
    %2330 = vst [vmem:[#allocation2 + $0x70] sm:$0xf] %v2202
    %2331 = vst [vmem:[#allocation2 + $0x74] sm:$0xf] %v2203
    %2332 = vst [vmem:[#allocation2 + $0x78] sm:$0xf] %v2204
    %2333 = vst [vmem:[#allocation2 + $0x7c] sm:$0xf] %v2205
    %2334 = vst [vmem:[#allocation2 + $0x80] sm:$0xf] %v2206
    %2335 = vst [vmem:[#allocation2 + $0x84] sm:$0xf] %v2207
    %2336 = vst [vmem:[#allocation2 + $0x88] sm:$0xf] %v2208
    %2337 = vst [vmem:[#allocation2 + $0x8c] sm:$0xf] %v2209
    %2338 = vst [vmem:[#allocation2 + $0x90] sm:$0xf] %v2210
    %2339 = vst [vmem:[#allocation2 + $0x94] sm:$0xf] %v2211
    %2340 = vst [vmem:[#allocation2 + $0x98] sm:$0xf] %v2212
    %2341 = vst [vmem:[#allocation2 + $0x9c] sm:$0xf] %v2213
    %2342 = vst [vmem:[#allocation2 + $0xa0] sm:$0xf] %v2214
    %2343 = vst [vmem:[#allocation2 + $0xa4] sm:$0xf] %v2215
    %2344 = vst [vmem:[#allocation2 + $0xa8] sm:$0xf] %v2216
    %2345 = vst [vmem:[#allocation2 + $0xac] sm:$0xf] %v2217
    %2346 = vst [vmem:[#allocation2 + $0xb0] sm:$0xf] %v2218
    %2347 = vst [vmem:[#allocation2 + $0xb4] sm:$0xf] %v2219
    %2348 = vst [vmem:[#allocation2 + $0xb8] sm:$0xf] %v2220
    %2349 = vst [vmem:[#allocation2 + $0xbc] sm:$0xf] %v2221
    %2350 = vst [vmem:[#allocation2 + $0xc0] sm:$0xf] %v2222
    %2351 = vst [vmem:[#allocation2 + $0xc4] sm:$0xf] %v2223
    %2352 = vst [vmem:[#allocation2 + $0xc8] sm:$0xf] %v2224
    %2353 = vst [vmem:[#allocation2 + $0xcc] sm:$0xf] %v2225
    %2354 = vst [vmem:[#allocation2 + $0xd0] sm:$0xf] %v2226
    %2355 = vst [vmem:[#allocation2 + $0xd4] sm:$0xf] %v2227
    %2356 = vst [vmem:[#allocation2 + $0xd8] sm:$0xf] %v2228
    %2357 = vst [vmem:[#allocation2 + $0xdc] sm:$0xf] %v2229
    %2358 = vst [vmem:[#allocation2 + $0xe0] sm:$0xf] %v2230
    %2359 = vst [vmem:[#allocation2 + $0xe4] sm:$0xf] %v2231
    %2360 = vst [vmem:[#allocation2 + $0xe8] sm:$0xf] %v2232
    %2361 = vst [vmem:[#allocation2 + $0xec] sm:$0xf] %v2233
    %2362 = vst [vmem:[#allocation2 + $0xf0] sm:$0xf] %v2234
    %2363 = vst [vmem:[#allocation2 + $0xf4] sm:$0xf] %v2235
    %2364 = vst [vmem:[#allocation2 + $0xf8] sm:$0xf] %v2236
    %2365 = vst [vmem:[#allocation2 + $0xfc] sm:$0xf] %v2237
    // Predicated region
    $region22: #{tpu_custom_call.1} parent=1 // pred_check
      _
    $region23: #{tpu_custom_call.1} parent=1 // pred_check_branch
      %2367 = sbr.rel (0) target = $region25
    $region24: #{tpu_custom_call.1} parent=1 // pred_region
      %s2369 = ssub.s32 4096, 4096
      %2370 = vsyncadd [#allocation3], %s2369
      %s2371 = sshll.u32 [#allocation2], 4
      %s2372 = int_to_ptr.vmem [resolvable:$true] %s2371
      %2377 = dma.vmem_to_hbm [thread:$0]  %s2372, 4096, %s5, [#allocation3], 64, 64, 4
    $region25: #{tpu_custom_call.1} parent=1 // pred_fallthru
      _
    // Predicated region
    $region26: #{tpu_custom_call.1} parent=1 // pred_check
      _
    $region27: #{tpu_custom_call.1} parent=1 // pred_check_branch
      %2379 = sbr.rel (0) target = $region29
    $region28: #{tpu_custom_call.1} parent=1 // pred_region
      %2380 = dma.done [#allocation3], 4096
    $region29: #{tpu_custom_call.1} parent=1 // pred_fallthru
      _
    %2381 = vsyncpa [#allocation3], 1

</llo_original>
